<compile_context>
chip_gen: v6e
topology: v6e:2x2x1
jax: 0.10.0
libtpu: 0.0.40
codegen_flags: <defaults>
</compile_context>

<pallas_src>
import functools

import jax
import jax.numpy as jnp
import numpy as np
from jax.experimental import pallas as pl
from jax.experimental.pallas import tpu as pltpu

STEM_KPAD = 256          # stem im2col K (7*7*3 = 147) zero-padded to the MXU depth
STRIDES = (1, 2, 2, 2)   # ResNet layer strides


# ---------------------------------------------------------------------------
# Pallas kernels
# ---------------------------------------------------------------------------
def _stem_kernel(p_ref, w_ref, b_ref, o_ref):
    """Stem 7x7/2 conv as a GEMM over host-side im2col patches (+folded BN +ReLU)."""
    acc = jnp.dot(p_ref[...], w_ref[...], preferred_element_type=jnp.float32) + b_ref[...]
    o_ref[...] = jnp.maximum(acc, 0.0).astype(o_ref.dtype)


def _tap_pool_kernel(x_ref, o_ref, *, taps, rout):
    """3x3 max-pool via 9 shifted-row maxes on zero-padded dense rows (post-ReLU so 0-pad is ok)."""
    m = x_ref[taps[0]:taps[0] + rout, :]
    for off in taps[1:]:
        m = jnp.maximum(m, x_ref[off:off + rout, :])
    o_ref[...] = m


def _chain_kernel(x_ref, cm_ref, w1_ref, s1_ref, w2_ref, s2_ref, w3_ref, s3_ref,
                  o_ref, a1_ref, *, wp, rout, taps):
    """One identity bottleneck per grid step; the activation stays resident in o_ref (VMEM)
    across the whole chain of blocks for the current image (output block index is constant
    along the block axis)."""
    b = pl.program_id(1)

    @pl.when(b == 0)
    def _():
        o_ref[...] = x_ref[...]          # load the layer input once per image

    cmask = cm_ref[...]                                   # [rout, 1] 1=valid col, 0=wrap col
    xin = o_ref[wp + 1: wp + 1 + rout, :]                 # block input at the valid dense rows

    # conv1 (1x1) + ReLU; zero the wrap columns so conv2's taps see proper zero padding.
    a1 = jnp.dot(xin, w1_ref[...], preferred_element_type=jnp.float32) + s1_ref[...]
    a1 = jnp.maximum(a1, 0.0) * cmask
    a1_ref[...] = jnp.zeros(a1_ref.shape, a1_ref.dtype)   # halo rows -> 0
    a1_ref[wp + 1: wp + 1 + rout, :] = a1.astype(a1_ref.dtype)

    # conv2 (3x3, stride 1): concat the 9 shifted row-slices -> one K-dense GEMM.
    tap_cat = jnp.concatenate([a1_ref[off: off + rout, :] for off in taps], axis=1)
    a2 = jnp.dot(tap_cat, w2_ref[...], preferred_element_type=jnp.float32) + s2_ref[...]
    a2 = jnp.maximum(a2, 0.0).astype(jnp.bfloat16)

    # conv3 (1x1) + residual + ReLU; re-zero wrap columns, write back into the resident layout.
    out = jnp.dot(a2, w3_ref[...], preferred_element_type=jnp.float32) + s3_ref[...]
    out = jnp.maximum(out + xin.astype(jnp.float32), 0.0) * cmask
    o_ref[wp + 1: wp + 1 + rout, :] = out.astype(o_ref.dtype)


def _down_kernel(x_ref, cm_ref, selD_ref, selP_ref, scat_ref,
                 w1_ref, s1_ref, w2_ref, s2_ref, w3_ref, s3_ref, wd_ref, sd_ref,
                 o_ref, a1_ref, *, wp_in, rout_dense, taps):
    """Fully fused downsample bottleneck (projection shortcut; conv2 may be stride 2), one image
    per grid step.  Strided output selection and the scatter into the padded output layout are
    done with tiny 0/1 matrices on the MXU."""
    cmask = cm_ref[...]                                      # [rout_dense, 1]
    xin = x_ref[wp_in + 1: wp_in + 1 + rout_dense, :]        # valid dense rows of the input

    # conv1 (1x1) + ReLU into the padded a1 layout.
    a1 = jnp.dot(xin, w1_ref[...], preferred_element_type=jnp.float32) + s1_ref[...]
    a1 = jnp.maximum(a1, 0.0) * cmask
    a1_ref[...] = jnp.zeros(a1_ref.shape, a1_ref.dtype)
    a1_ref[wp_in + 1: wp_in + 1 + rout_dense, :] = a1.astype(a1_ref.dtype)

    # conv2 (3x3, stride s): tap-concat, compact to the strided output positions, one GEMM.
    tap_cat = jnp.concatenate([a1_ref[off: off + rout_dense, :] for off in taps], axis=1)
    tap_sel = jnp.dot(selD_ref[...], tap_cat,
                      preferred_element_type=jnp.float32).astype(jnp.bfloat16)
    a2 = jnp.dot(tap_sel, w2_ref[...], preferred_element_type=jnp.float32) + s2_ref[...]
    a2 = jnp.maximum(a2, 0.0).astype(jnp.bfloat16)

    # projection shortcut on the strided input positions.
    xs = jnp.dot(selP_ref[...], x_ref[...],
                 preferred_element_type=jnp.float32).astype(jnp.bfloat16)
    ident = jnp.dot(xs, wd_ref[...], preferred_element_type=jnp.float32) + sd_ref[...]

    # conv3 (1x1) + shortcut + ReLU, then scatter into the padded dense-row output layout
    # (halo rows come out as exact zeros).
    out = jnp.dot(a2, w3_ref[...], preferred_element_type=jnp.float32) + s3_ref[...]
    out = jnp.maximum(out + ident, 0.0).astype(jnp.bfloat16)
    o_ref[...] = jnp.dot(scat_ref[...], out,
                         preferred_element_type=jnp.float32).astype(o_ref.dtype)


def _head_kernel(x_ref, w_ref, b_ref, o_ref, *, wp, rout, inv_hw):
    """Global avg-pool (on the padded layout) -> Linear(no bias, BN scale folded) -> +shift ->
    L2 normalize.  Wrap columns in the padded layout are zero so they do not affect the sum."""
    xs = x_ref[:, wp + 1: wp + 1 + rout, :].astype(jnp.float32)    # [B, rout, C]
    pooled = jnp.sum(xs, axis=1) * inv_hw                          # [B, C]
    emb = jnp.dot(pooled.astype(jnp.bfloat16), w_ref[...],
                  preferred_element_type=jnp.float32) + b_ref[...]
    ss = jnp.maximum(jnp.sum(emb * emb, axis=1, keepdims=True), 1e-24)
    r = jax.lax.rsqrt(ss)
    r = r * (1.5 - 0.5 * ss * r * r)       # one Newton step: ||out|| == 1 to f32 accuracy
    o_ref[...] = emb * r


# ---------------------------------------------------------------------------
# Geometry helpers / host-precomputed selection matrices
# ---------------------------------------------------------------------------
def _pl_geom(h, w):
    wp = w + 2
    hp = h + 3
    return wp, hp, hp * wp, h * wp       # wp, hp, rpad, rout(dense)


@functools.lru_cache(maxsize=None)
def _chain_cmask(h, w):
    wp = w + 2
    cm = (np.arange(h * wp) % wp < w).astype(np.float32).reshape(-1, 1)
    return jnp.asarray(cm)


@functools.lru_cache(maxsize=None)
def _down_mats(h, w, s):
    """Column mask + strided-selection / scatter matrices for a downsample bottleneck."""
    wp_in, _, rpad_in, rout_dense = _pl_geom(h, w)
    ho, wo = (h - 1) // s + 1, (w - 1) // s + 1
    wp_out, _, rpad_out, _ = _pl_geom(ho, wo)
    m_out = ho * wo
    cm = (np.arange(rout_dense) % wp_in < w).astype(np.float32).reshape(-1, 1)
    selD = np.zeros((m_out, rout_dense), np.float32)
    selP = np.zeros((m_out, rpad_in), np.float32)
    scat = np.zeros((rpad_out, m_out), np.float32)
    for ro in range(ho):
        for co in range(wo):
            mi = ro * wo + co
            selD[mi, (s * ro) * wp_in + s * co] = 1.0
            selP[mi, (s * ro + 1) * wp_in + (s * co + 1)] = 1.0
            scat[(ro + 1) * wp_out + co + 1, mi] = 1.0
    return (jnp.asarray(cm),
            jnp.asarray(selD, dtype=jnp.bfloat16),
            jnp.asarray(selP, dtype=jnp.bfloat16),
            jnp.asarray(scat, dtype=jnp.bfloat16))


# ---------------------------------------------------------------------------
# pallas_call builders (cached so identical geometries reuse one executable)
# ---------------------------------------------------------------------------
@functools.lru_cache(maxsize=None)
def _build_stem(m, k, nch):
    tm = m // 2 if (m % 2 == 0 and m >= 512) else m
    call = pl.pallas_call(
        _stem_kernel,
        grid=(pl.cdiv(m, tm),),
        in_specs=[pl.BlockSpec((tm, k), lambda i: (i, 0)),
                  pl.BlockSpec((k, nch), lambda i: (0, 0)),
                  pl.BlockSpec((1, nch), lambda i: (0, 0))],
        out_specs=pl.BlockSpec((tm, nch), lambda i: (i, 0)),
        out_shape=jax.ShapeDtypeStruct((m, nch), jnp.bfloat16),
        compiler_params=pltpu.CompilerParams(dimension_semantics=("parallel",)),
    )
    return jax.jit(call)


@functools.lru_cache(maxsize=None)
def _build_pool(n, rpad, c, rout, taps):
    kernel = functools.partial(_tap_pool_kernel, taps=taps, rout=rout)
    call = pl.pallas_call(
        kernel,
        grid=(n,),
        in_specs=[pl.BlockSpec((None, rpad, c), lambda b: (b, 0, 0))],
        out_specs=pl.BlockSpec((None, rout, c), lambda b: (b, 0, 0)),
        out_shape=jax.ShapeDtypeStruct((n, rout, c), jnp.bfloat16),
        compiler_params=pltpu.CompilerParams(dimension_semantics=("parallel",)),
    )
    return jax.jit(call)


@functools.lru_cache(maxsize=None)
def _build_chain(n, nb, h, w, c4, planes):
    wp, _, rpad, rout = _pl_geom(h, w)
    taps = tuple(i * wp + j for i in range(3) for j in range(3))
    kernel = functools.partial(_chain_kernel, wp=wp, rout=rout, taps=taps)
    call = pl.pallas_call(
        kernel,
        grid=(n, nb),
        in_specs=[
            pl.BlockSpec((None, rpad, c4), lambda i, b: (i, 0, 0)),          # layer input (PL)
            pl.BlockSpec((rout, 1), lambda i, b: (0, 0)),                    # column mask
            pl.BlockSpec((None, c4, planes), lambda i, b: (b, 0, 0)),        # w1[b]
            pl.BlockSpec((None, 1, planes), lambda i, b: (b, 0, 0)),         # shift1[b]
            pl.BlockSpec((None, 9 * planes, planes), lambda i, b: (b, 0, 0)),  # w2[b]
            pl.BlockSpec((None, 1, planes), lambda i, b: (b, 0, 0)),         # shift2[b]
            pl.BlockSpec((None, planes, c4), lambda i, b: (b, 0, 0)),        # w3[b]
            pl.BlockSpec((None, 1, c4), lambda i, b: (b, 0, 0)),             # shift3[b]
        ],
        out_specs=pl.BlockSpec((None, rpad, c4), lambda i, b: (i, 0, 0)),    # resident across b
        out_shape=jax.ShapeDtypeStruct((n, rpad, c4), jnp.bfloat16),
        scratch_shapes=[pltpu.VMEM((rpad, planes), jnp.bfloat16)],           # a1 (padded layout)
        compiler_params=pltpu.CompilerParams(
            dimension_semantics=("parallel", "arbitrary")),
    )
    return jax.jit(call)


@functools.lru_cache(maxsize=None)
def _build_down(n, h, w, s, cin, planes, cout):
    wp_in, _, rpad_in, rout_dense = _pl_geom(h, w)
    ho, wo = (h - 1) // s + 1, (w - 1) // s + 1
    _, _, rpad_out, _ = _pl_geom(ho, wo)
    m_out = ho * wo
    taps = tuple(i * wp_in + j for i in range(3) for j in range(3))
    kernel = functools.partial(_down_kernel, wp_in=wp_in, rout_dense=rout_dense, taps=taps)
    z = lambda i: (0, 0)
    call = pl.pallas_call(
        kernel,
        grid=(n,),
        in_specs=[
            pl.BlockSpec((None, rpad_in, cin), lambda i: (i, 0, 0)),   # x (PL)
            pl.BlockSpec((rout_dense, 1), z),                          # column mask
            pl.BlockSpec((m_out, rout_dense), z),                      # strided output selector
            pl.BlockSpec((m_out, rpad_in), z),                         # strided input selector
            pl.BlockSpec((rpad_out, m_out), z),                        # PL scatter
            pl.BlockSpec((cin, planes), z),                            # w1
            pl.BlockSpec((1, planes), z),
            pl.BlockSpec((9 * planes, planes), z),                     # w2
            pl.BlockSpec((1, planes), z),
            pl.BlockSpec((planes, cout), z),                           # w3
            pl.BlockSpec((1, cout), z),
            pl.BlockSpec((cin, cout), z),                              # projection
            pl.BlockSpec((1, cout), z),
        ],
        out_specs=pl.BlockSpec((None, rpad_out, cout), lambda i: (i, 0, 0)),
        out_shape=jax.ShapeDtypeStruct((n, rpad_out, cout), jnp.bfloat16),
        scratch_shapes=[pltpu.VMEM((rpad_in, planes), jnp.bfloat16)],
        compiler_params=pltpu.CompilerParams(dimension_semantics=("parallel",)),
    )
    return jax.jit(call)


@functools.lru_cache(maxsize=None)
def _build_head(n, rpad, c, e, wp, rout, hw):
    kernel = functools.partial(_head_kernel, wp=wp, rout=rout, inv_hw=1.0 / hw)
    call = pl.pallas_call(kernel, out_shape=jax.ShapeDtypeStruct((n, e), jnp.float32))
    return jax.jit(call)


# ---------------------------------------------------------------------------
# Host-side wrappers (once-per-forward glue only; no per-block host ops)
# ---------------------------------------------------------------------------
def _im2col(x, k, stride, pad, k_pad):
    """Host-side im2col for the 7x7 stem only (Cin=3 -> tiny patch matrix)."""
    n, h, w, c = x.shape
    xp = jnp.pad(x, ((0, 0), (pad, pad), (pad, pad), (0, 0)))
    ho = (h + 2 * pad - k) // stride + 1
    wo = (w + 2 * pad - k) // stride + 1
    cols = [xp[:, i:i + (ho - 1) * stride + 1:stride,
               j:j + (wo - 1) * stride + 1:stride, :]
            for i in range(k) for j in range(k)]
    patches = jnp.concatenate(cols, axis=-1).reshape(n * ho * wo, k * k * c)
    if k_pad > k * k * c:
        patches = jnp.pad(patches, ((0, 0), (0, k_pad - k * k * c)))
    return patches, ho, wo


def maxpool2d(x, k=3, stride=2, pad=1):
    """3x3/2 max-pool via in-kernel shifted-row maxes (values are post-ReLU, so 0-padding is
    exactly equivalent to -inf padding)."""
    n, h, w, c = x.shape
    ho = (h + 2 * pad - k) // stride + 1
    wo = (w + 2 * pad - k) // stride + 1
    yd = (ho - 1) * stride + 1
    wp = w + 2 * pad
    hp = yd + k
    rout, rpad = yd * wp, hp * wp
    taps = tuple(i * wp + j for i in range(k) for j in range(k))
    xp = jnp.pad(x, ((0, 0), (pad, hp - h - pad), (pad, pad), (0, 0)))
    out = _build_pool(n, rpad, c, rout, taps)(xp.reshape(n, rpad, c))
    out = out.reshape(n, yd, wp, c)
    return out[:, 0:yd:stride, 0:(wo - 1) * stride + 1:stride, :]


def _to_pl(y):
    """NHWC -> padded dense-row layout [(h+3)*(w+2), c] with zero halo."""
    n, h, w, c = y.shape
    yp = jnp.pad(y, ((0, 0), (1, 2), (1, 1), (0, 0)))
    return yp.reshape(n, (h + 3) * (w + 2), c)


def _downsample_block(act, dp, n, h, w, s):
    cin = act.shape[-1]
    planes = dp["w1"].shape[1]
    cout = dp["w3"].shape[1]
    cm, selD, selP, scat = _down_mats(h, w, s)
    call = _build_down(n, h, w, s, cin, planes, cout)
    return call(act, cm, selD, selP, scat,
                dp["w1"], dp["s1"], dp["w2"], dp["s2"],
                dp["w3"], dp["s3"], dp["wd"], dp["sd"])


def _chain_blocks(act, cp, n, h, w):
    nb, c4, planes = cp["w1"].shape
    if nb == 0:
        return act
    call = _build_chain(n, nb, h, w, c4, planes)
    return call(act, _chain_cmask(h, w),
                cp["w1"], cp["s1"], cp["w2"], cp["s2"], cp["w3"], cp["s3"])


def _head_embed(act, head, n, h, w):
    rpad, c = act.shape[1], act.shape[2]
    wp = w + 2
    e = head["w"].shape[1]
    return _build_head(n, rpad, c, e, wp, h * wp, h * w)(act, head["w"], head["shift"])


# ---------------------------------------------------------------------------
# Deterministic parameter initialization (synthetic weights, BN scale folded into weights)
# ---------------------------------------------------------------------------
def _conv_bn(key, kh, kw, cin, cout, eps=1e-5):
    kwt, kg, kb, km, kv = jax.random.split(key, 5)
    fan_in = kh * kw * cin
    w = jax.random.normal(kwt, (kh, kw, cin, cout), jnp.float32) * np.sqrt(2.0 / fan_in)
    gamma = 1.0 + 0.1 * jax.random.normal(kg, (cout,), jnp.float32)
    beta = 0.1 * jax.random.normal(kb, (cout,), jnp.float32)
    r_mean = 0.1 * jax.random.normal(km, (cout,), jnp.float32)
    r_var = jax.random.uniform(kv, (cout,), jnp.float32, minval=0.5, maxval=1.5)
    scale = gamma * jax.lax.rsqrt(r_var + eps)
    shift = beta - r_mean * scale
    w = (w * scale).reshape(fan_in, cout)
    return w.astype(jnp.bfloat16), shift.reshape(1, cout).astype(jnp.float32)


def init_resnet101_params(key, base=16, embedding_dim=256):
    """ResNet-101 topology: blocks [3, 4, 23, 3], Bottleneck (expansion=4).  Channel widths
    scaled down by base (=16 instead of 64) to keep the synthetic model small."""
    expansion = 4
    block_counts = [3, 4, 23, 3]

    params = {}
    key, k = jax.random.split(key)
    sw, ss = _conv_bn(k, 7, 7, 3, base)
    params["stem"] = {"w": jnp.pad(sw, ((0, STEM_KPAD - sw.shape[0]), (0, 0))), "shift": ss}

    inplanes = base
    layers = []
    for li, nblocks in enumerate(block_counts):
        planes = base * (2 ** li)
        key, k1, k2, k3, k4 = jax.random.split(key, 5)
        w1, s1 = _conv_bn(k1, 1, 1, inplanes, planes)
        w2, s2 = _conv_bn(k2, 3, 3, planes, planes)
        w3, s3 = _conv_bn(k3, 1, 1, planes, planes * expansion)
        wd, sd = _conv_bn(k4, 1, 1, inplanes, planes * expansion)
        down = {"w1": w1, "s1": s1, "w2": w2, "s2": s2, "w3": w3, "s3": s3, "wd": wd, "sd": sd}
        inplanes = planes * expansion

        cw1, cs1, cw2, cs2, cw3, cs3 = [], [], [], [], [], []
        for _ in range(1, nblocks):
            key, k1, k2, k3 = jax.random.split(key, 4)
            w1, s1 = _conv_bn(k1, 1, 1, inplanes, planes)
            w2, s2 = _conv_bn(k2, 3, 3, planes, planes)
            w3, s3 = _conv_bn(k3, 1, 1, planes, inplanes)
            cw1.append(w1); cs1.append(s1)
            cw2.append(w2); cs2.append(s2)
            cw3.append(w3); cs3.append(s3)
        chain = {"w1": jnp.stack(cw1), "s1": jnp.stack(cs1),
                 "w2": jnp.stack(cw2), "s2": jnp.stack(cs2),
                 "w3": jnp.stack(cw3), "s3": jnp.stack(cs3)}
        layers.append({"down": down, "chain": chain})
    params["layers"] = layers

    # Head: nn.Linear(inplanes, embedding_dim, bias=False) + nn.BatchNorm1d(embedding_dim, eps=1e-3)
    key, kf, kg, kb, km, kv = jax.random.split(key, 6)
    fc_w = jax.random.normal(kf, (inplanes, embedding_dim), jnp.float32) / np.sqrt(inplanes)
    gamma = 1.0 + 0.1 * jax.random.normal(kg, (embedding_dim,), jnp.float32)
    beta = 0.1 * jax.random.normal(kb, (embedding_dim,), jnp.float32)
    r_mean = 0.1 * jax.random.normal(km, (embedding_dim,), jnp.float32)
    r_var = jax.random.uniform(kv, (embedding_dim,), jnp.float32, minval=0.5, maxval=1.5)
    scale = gamma * jax.lax.rsqrt(r_var + 1e-3)
    shift = beta - r_mean * scale
    params["head"] = {"w": (fc_w * scale).astype(jnp.bfloat16),
                      "shift": shift.reshape(1, embedding_dim).astype(jnp.float32)}
    return params


# ---------------------------------------------------------------------------
# Forward pass
# ---------------------------------------------------------------------------
def resnet101_triplet_forward(params, images_nchw):
    """images_nchw: [N, 3, H, W] (PyTorch layout).  Returns L2-normalized embeddings [N, E]."""
    x = jnp.transpose(images_nchw, (0, 2, 3, 1)).astype(jnp.bfloat16)   # NCHW -> NHWC, bf16
    n = x.shape[0]

    # Stem: 7x7/2 conv + folded BN + ReLU (host im2col, K padded to the MXU depth).
    patches, ho, wo = _im2col(x, k=7, stride=2, pad=3, k_pad=STEM_KPAD)
    nch = params["stem"]["w"].shape[1]
    y = _build_stem(patches.shape[0], STEM_KPAD, nch)(patches, params["stem"]["w"],
                                                      params["stem"]["shift"])
    y = y.reshape(n, ho, wo, nch)

    # 3x3/2 max-pool, then move into the padded dense-row layout used by the whole backbone.
    y = maxpool2d(y, k=3, stride=2, pad=1)
    h, w = y.shape[1], y.shape[2]
    act = _to_pl(y)

    # layer1..layer4: one fused downsample block + one fused identity chain per layer.
    for li, layer in enumerate(params["layers"]):
        s = STRIDES[li]
        act = _downsample_block(act, layer["down"], n, h, w, s)
        h, w = (h - 1) // s + 1, (w - 1) // s + 1
        act = _chain_blocks(act, layer["chain"], n, h, w)

    # avgpool + fc + BN1d + L2 normalize
    return _head_embed(act, params["head"], n, h, w)


# ---------------------------------------------------------------------------
if __name__ == "__main__":
    key = jax.random.PRNGKey(0)
    pkey, xkey = jax.random.split(key)

    EMBED_DIM = 256
    params = init_resnet101_params(pkey, base=16, embedding_dim=EMBED_DIM)

    # Small deterministic input: batch=2, 3 channels, 64x64 spatial (NCHW like PyTorch).
    images = jax.random.normal(xkey, (2, 3, 64, 64), jnp.float32)

    fwd = jax.jit(resnet101_triplet_forward)
    emb = jax.block_until_ready(fwd(params, images))

    assert emb.shape == (2, EMBED_DIM), emb.shape
    assert bool(jnp.all(jnp.isfinite(emb)))
    norms = jnp.linalg.norm(emb, axis=1)
    assert bool(jnp.allclose(norms, 1.0, atol=1e-4)), norms

    print("KERNEL_OK")
</pallas_src>

<mosaic_0001>
module attributes {stable_mosaic.version = 11 : i64} {
  func.func @_stem_kernel(%arg0: i32, %arg1: memref<1024x256xbf16, #tpu.memory_space<vmem>>, %arg2: memref<256x16xbf16, #tpu.memory_space<vmem>>, %arg3: memref<1x16xf32, #tpu.memory_space<vmem>>, %arg4: memref<1024x16xbf16, #tpu.memory_space<vmem>>) attributes {dimension_semantics = [#tpu.dimension_semantics<parallel>], iteration_bounds = array<i64: 2>, scalar_prefetch = 0 : i64, scratch_operands = 0 : i64, tpu.core_type = #tpu.core_type<tc>, window_params = [{transform_indices = @transform_0, window_bounds = array<i64: 1024, 256>}, {pipeline_mode = #tpu.pipeline_mode<synchronous>, transform_indices = @transform_1, window_bounds = array<i64: 256, 16>}, {pipeline_mode = #tpu.pipeline_mode<synchronous>, transform_indices = @transform_2, window_bounds = array<i64: 1, 16>}, {transform_indices = @transform_3, window_bounds = array<i64: 1024, 16>}]} {
    %c0 = arith.constant 0 : index
    %c0_0 = arith.constant 0 : index
    %0 = vector.load %arg1[%c0, %c0_0] : memref<1024x256xbf16, #tpu.memory_space<vmem>>, vector<1024x256xbf16>
    %c0_1 = arith.constant 0 : index
    %c0_2 = arith.constant 0 : index
    %1 = vector.load %arg2[%c0_1, %c0_2] : memref<256x16xbf16, #tpu.memory_space<vmem>>, vector<256x16xbf16>
    %cst = arith.constant dense<0.000000e+00> : vector<1024x16xf32>
    %2 = tpu.matmul %0, %1, %cst {dimension_numbers = #tpu.dot_dimension_numbers<[1], [0], [0], [1], [0, 0, 1, 1], [], []>} : vector<1024x256xbf16>, vector<256x16xbf16>, vector<1024x16xf32> -> vector<1024x16xf32>
    %c0_3 = arith.constant 0 : index
    %c0_4 = arith.constant 0 : index
    %3 = vector.load %arg3[%c0_3, %c0_4] : memref<1x16xf32, #tpu.memory_space<vmem>>, vector<1x16xf32>
    %4 = vector.broadcast %3 : vector<1x16xf32> to vector<1024x16xf32>
    %5 = arith.addf %2, %4 : vector<1024x16xf32>
    %cst_5 = arith.constant 0.000000e+00 : f32
    %6 = vector.broadcast %cst_5 : f32 to vector<1024x16xf32>
    %7 = arith.maximumf %5, %6 : vector<1024x16xf32>
    %8 = arith.truncf %7 : vector<1024x16xf32> to vector<1024x16xbf16>
    %c0_6 = arith.constant 0 : index
    %c0_7 = arith.constant 0 : index
    %9 = vector.load %arg4[%c0_6, %c0_7] : memref<1024x16xbf16, #tpu.memory_space<vmem>>, vector<1024x16xbf16>
    tpu.vector_store %arg4[%c0_6, %c0_7], %8 {strides = array<i32>} : memref<1024x16xbf16, #tpu.memory_space<vmem>>, vector<1024x16xbf16>,
    return
  }
  func.func @transform_0(%arg0: i32) -> (i32, i32) {
    %c0_i32 = arith.constant 0 : i32
    %c0_i32_0 = arith.constant 0 : i32
    return %arg0, %c0_i32 : i32, i32
  }
  func.func @transform_1(%arg0: i32) -> (i32, i32) {
    %c0_i32 = arith.constant 0 : i32
    %c0_i32_0 = arith.constant 0 : i32
    %c0_i32_1 = arith.constant 0 : i32
    return %c0_i32, %c0_i32_0 : i32, i32
  }
  func.func @transform_2(%arg0: i32) -> (i32, i32) {
    %c0_i32 = arith.constant 0 : i32
    %c0_i32_0 = arith.constant 0 : i32
    %c0_i32_1 = arith.constant 0 : i32
    return %c0_i32, %c0_i32_0 : i32, i32
  }
  func.func @transform_3(%arg0: i32) -> (i32, i32) {
    %c0_i32 = arith.constant 0 : i32
    %c0_i32_0 = arith.constant 0 : i32
    return %arg0, %c0_i32 : i32, i32
  }
}

</mosaic_0001>

<llo_original>
// kernel: tpu_custom_call.1
$region0: #{tpu_custom_call.1}
  #allocation0 [shape = 'u32[]', space=smem, size = 0x4, offset = 0x4, fixed_abs, tag = 'smem constant byte address 0x4 - core index']
  #allocation1 [shape = 'u32[144,128]{1,0:T(1,128)}', space=vmem, size = 0x12000, scoped, tag = 'internal scratch']
  %s0 = inlined_call_operand.hbm [shape: bf16[2048,256], index: 0, kind: input, shape index: {}]
  %s1 = inlined_call_operand.vmem [shape: bf16[256,16], index: 1, kind: input, shape index: {}]
  %s2 = inlined_call_operand.vmem [shape: f32[1,16], index: 2, kind: input, shape index: {}]
  %s3 = inlined_call_operand.vmem [shape: bf16[2048,16], index: 3, kind: output, shape index: {}]
  %s4 = sld [smem:[#allocation0]]
  $region49: #{tpu_custom_call.1} parent=0
    _
  %s6 = ssub.s32 1, %s4
  %s7 = scalar_select 0, %s6, %s4
  $region1: #{tpu_custom_call.1} parent=0
    #allocation2 [shape = 'u8[1048576]{0}', space=vmem, size = 0x100000, scoped, tag = 'input window, operand 0']
    #allocation3 [shape = 's32[2]{0}', space=sflag, size = 0x8, scoped, tag = 'scoped memory for tpu_custom_call.1']
    %8 = vsyncpa [#allocation3], 0
    %s9 = scalar_lea.sflag [#allocation3], 1
    %10 = vsyncpa %s9, 0
    loop: start=0, step=1, limit=4
    $region2: #{tpu_custom_call.1} parent=1 // loop_pre_header
      _
    $region3: #{tpu_custom_call.1} parent=1 // loop_header
      %s12 = sphi 0, %s16
      %p13 = scmp.ge.s32.totalorder %s12, 4
      %s22 = sphi 0, %s24
      %s25 = sphi 0, %s22
      %s26 = sphi 0, %s25
      %s42 = sphi 0, %s26
      %s46 = sphi 0, %s46
      %s48 = sphi 0, %s46
      %s49 = sphi 0, %s48
      %s63 = sphi 0, %s49
      %s67 = sphi 0, %s67
      %s69 = sphi 0, %s67
      %s70 = sphi 0, %s69
      %s84 = sphi 0, %s70
      %s90 = sphi 0, %s92
      %s93 = sphi 0, %s90
      %s94 = sphi 0, %s93
      %s110 = sphi 0, %s94
    $region4: #{tpu_custom_call.1} parent=1 // loop_header_branch
      %15 = sbr.rel (%p13) target = $region8
    $region5: #{tpu_custom_call.1} parent=1 // loop_body
      %s17 = ssub.s32 %s12, 1
      %s18 = ssub.s32 %s12, 2
      %s19 = sadd.s32 %s12, 1
      %s20 = ssub.s32 %s12, %s19
      %p21 = scmp.eq.s32.totalorder %s20, 0
      %s23 = sadd.s32 %s22, 1
      %s24 = scalar_select %p21, %s22, %s23
      %p27 = pneg %p21
      %p28 = scmp.eq.s32.totalorder %s12, 1
      %p29 = por %p27, %p28
      %p30 = scmp.ne.s32.totalorder %s22, %s25
      %p31 = scmp.eq.s32.totalorder %s12, 0
      %p32 = por %p30, %p31
      %p33 = scmp.ne.s32.totalorder %s22, %s25
      %p34 = scmp.eq.s32.totalorder %s17, 1
      %p35 = por %p33, %p34
      %p36 = scmp.ne.s32.totalorder %s25, %s26
      %p37 = scmp.eq.s32.totalorder %s17, 0
      %p38 = por %p36, %p37
      %p39 = scmp.ne.s32.totalorder %s25, %s26
      %p40 = scmp.eq.s32.totalorder %s18, 1
      %p41 = por %p39, %p40
      %p43 = scmp.ne.s32.totalorder %s26, %s42
      %p44 = scmp.eq.s32.totalorder %s18, 0
      %p45 = por %p43, %p44
      %s47 = sadd.s32 %s46, 1
      %p50 = scmp.eq.s32.totalorder %s12, 1
      %p51 = scmp.ne.s32.totalorder %s46, %s48
      %p52 = scmp.eq.s32.totalorder %s12, 0
      %p53 = por %p51, %p52
      %p54 = scmp.ne.s32.totalorder %s46, %s48
      %p55 = scmp.eq.s32.totalorder %s17, 1
      %p56 = por %p54, %p55
      %p57 = scmp.ne.s32.totalorder %s48, %s49
      %p58 = scmp.eq.s32.totalorder %s17, 0
      %p59 = por %p57, %p58
      %p60 = scmp.ne.s32.totalorder %s48, %s49
      %p61 = scmp.eq.s32.totalorder %s18, 1
      %p62 = por %p60, %p61
      %p64 = scmp.ne.s32.totalorder %s49, %s63
      %p65 = scmp.eq.s32.totalorder %s18, 0
      %p66 = por %p64, %p65
      %s68 = sadd.s32 %s67, 1
      %p71 = scmp.eq.s32.totalorder %s12, 1
      %p72 = scmp.ne.s32.totalorder %s67, %s69
      %p73 = scmp.eq.s32.totalorder %s12, 0
      %p74 = por %p72, %p73
      %p75 = scmp.ne.s32.totalorder %s67, %s69
      %p76 = scmp.eq.s32.totalorder %s17, 1
      %p77 = por %p75, %p76
      %p78 = scmp.ne.s32.totalorder %s69, %s70
      %p79 = scmp.eq.s32.totalorder %s17, 0
      %p80 = por %p78, %p79
      %p81 = scmp.ne.s32.totalorder %s69, %s70
      %p82 = scmp.eq.s32.totalorder %s18, 1
      %p83 = por %p81, %p82
      %p85 = scmp.ne.s32.totalorder %s70, %s84
      %p86 = scmp.eq.s32.totalorder %s18, 0
      %p87 = por %p85, %p86
      %s88 = ssub.s32 %s12, %s19
      %p89 = scmp.eq.s32.totalorder %s88, 0
      %s91 = sadd.s32 %s90, 1
      %s92 = scalar_select %p89, %s90, %s91
      %p95 = pneg %p89
      %p96 = scmp.eq.s32.totalorder %s12, 1
      %p97 = por %p95, %p96
      %p98 = scmp.ne.s32.totalorder %s90, %s93
      %p99 = scmp.eq.s32.totalorder %s12, 0
      %p100 = por %p98, %p99
      %p101 = scmp.ne.s32.totalorder %s90, %s93
      %p102 = scmp.eq.s32.totalorder %s17, 1
      %p103 = por %p101, %p102
      %p104 = scmp.ne.s32.totalorder %s93, %s94
      %p105 = scmp.eq.s32.totalorder %s17, 0
      %p106 = por %p104, %p105
      %p107 = scmp.ne.s32.totalorder %s93, %s94
      %p108 = scmp.eq.s32.totalorder %s18, 1
      %p109 = por %p107, %p108
      %p111 = scmp.ne.s32.totalorder %s94, %s110
      %p112 = scmp.eq.s32.totalorder %s18, 0
      %p113 = por %p111, %p112
      %p114 = scmp.le.s32.totalorder 1, %s12
      %p115 = scmp.lt.s32.totalorder %s12, 3
      %p116 = pnand %p114, %p115
      %p117 = pneg %p116
      // Predicated region
      $region9: #{tpu_custom_call.1} parent=5 // pred_check
        _
      $region10: #{tpu_custom_call.1} parent=5 // pred_check_branch
        %119 = sbr.rel (%p116) target = $region12
      $region11: #{tpu_custom_call.1} parent=5 // pred_region
        %s120 = ssub.s32 %s12, 1
        // Predicated region
        $region13: #{tpu_custom_call.1} parent=11 // pred_check
          %p121 = pneg %p59
        $region14: #{tpu_custom_call.1} parent=11 // pred_check_branch
          %123 = sbr.rel (%p121) target = $region16
        $region15: #{tpu_custom_call.1} parent=11 // pred_region
          _
        $region16: #{tpu_custom_call.1} parent=11 // pred_fallthru
          _
        // Predicated region
        $region17: #{tpu_custom_call.1} parent=11 // pred_check
          %p124 = pneg %p80
        $region18: #{tpu_custom_call.1} parent=11 // pred_check_branch
          %126 = sbr.rel (%p124) target = $region20
        $region19: #{tpu_custom_call.1} parent=11 // pred_region
          _
        $region20: #{tpu_custom_call.1} parent=11 // pred_fallthru
          _
      $region12: #{tpu_custom_call.1} parent=5 // pred_fallthru
        _
      %p127 = scmp.lt.s32.totalorder %s12, 2
      // Predicated region
      $region21: #{tpu_custom_call.1} parent=5 // pred_check
        %p128 = pneg %p127
      $region22: #{tpu_custom_call.1} parent=5 // pred_check_branch
        %130 = sbr.rel (%p128) target = $region24
      $region23: #{tpu_custom_call.1} parent=5 // pred_region
        // Predicated region
        $region25: #{tpu_custom_call.1} parent=23 // pred_check
          %p131 = pneg %p32
        $region26: #{tpu_custom_call.1} parent=23 // pred_check_branch
          %133 = sbr.rel (%p131) target = $region28
        $region27: #{tpu_custom_call.1} parent=23 // pred_region
          %s134 = sand.u32 %s22, 1
          %s135 = scalar_lea.sflag [#allocation3], %s134
          %s136 = sand.u32 %s22, 1
          %s137 = smul.addr %s136, 1024
          %s138 = scalar_lea.vmem [#allocation2], %s137
          %s139 = smul.u32 128, %s12
          %s141 = ssub.s32 16384, 16384
          %142 = vsyncadd %s135, %s141
          %s143 = smul.addr %s139, 2
          %s144 = smul.addr %s143, 64
          %s145 = scalar_lea.hbm %s0, %s144
          %s146 = sshll.u32 %s138, 4
          %s147 = int_to_ptr.vmem [resolvable:$true] %s146
          %152 = dma.hbm_to_vmem [thread:$0]  %s145, 16384, %s147, %s135, 128, 128, 8
        $region28: #{tpu_custom_call.1} parent=23 // pred_fallthru
          _
      $region24: #{tpu_custom_call.1} parent=5 // pred_fallthru
        _
      %p153 = scmp.le.s32.totalorder 1, %s12
      %p154 = scmp.lt.s32.totalorder %s12, 3
      %p155 = pnand %p153, %p154
      %p156 = pneg %p155
      // Predicated region
      $region29: #{tpu_custom_call.1} parent=5 // pred_check
        _
      $region30: #{tpu_custom_call.1} parent=5 // pred_check_branch
        %158 = sbr.rel (%p155) target = $region32
      $region31: #{tpu_custom_call.1} parent=5 // pred_region
        %s159 = ssub.s32 %s12, 1
        %s160 = sand.u32 %s25, 1
        %s161 = scalar_lea.sflag [#allocation3], %s160
        %s162 = sand.u32 %s25, 1
        %s163 = smul.addr %s162, 1024
        %s164 = scalar_lea.vmem [#allocation2], %s163
        // Predicated region
        $region33: #{tpu_custom_call.1} parent=31 // pred_check
          %p165 = pneg %p38
        $region34: #{tpu_custom_call.1} parent=31 // pred_check_branch
          %167 = sbr.rel (%p165) target = $region36
        $region35: #{tpu_custom_call.1} parent=31 // pred_region
          %168 = dma.done %s161, 16384
        $region36: #{tpu_custom_call.1} parent=31 // pred_fallthru
          _
        %s169 = sand.u32 %s25, 1
        %s170 = scalar_lea.sflag [#allocation3], %s169
        %s171 = sand.u32 %s25, 1
        %s172 = smul.addr %s171, 1024
        %s173 = scalar_lea.vmem [#allocation2], %s172
        %p174 = pneg %p38
        %p175 = pneg %p35
        %p176 = pneg %p59
        %p177 = pneg %p56
        %p178 = pneg %p80
        %p179 = pneg %p77
        %p180 = pneg %p106
        %p181 = pneg %p103
        %s182 = smul.u32 128, %s17
        %p183 = scmp.lt.s32.totalorder %s182, 255
        %s184 = scalar_select %p183, %s182, 255
        %s185 = smul.addr %s184, 4
        %s186 = scalar_lea.vmem %s3, %s185
        %s187 = smul.u32 128, %s17
        %s188 = smul.u32 128, %s17
        %p189 = scmp.lt.s32.totalorder %s188, 255
        %s190 = scalar_select %p189, %s188, 255
        %s191 = smul.addr %s190, 4
        %s192 = scalar_lea.vmem %s3, %s191
        %s193 = smul.u32 128, %s17
        %v195 = vld [vmem:[%s164] sm:$0xff]
        %v196 = vld [vmem:[%s164 + $0x8] sm:$0xff]
        %v197 = vld [vmem:[%s164 + $0x10] sm:$0xff]
        %v198 = vld [vmem:[%s164 + $0x18] sm:$0xff]
        %v199 = vld [vmem:[%s164 + $0x20] sm:$0xff]
        %v200 = vld [vmem:[%s164 + $0x28] sm:$0xff]
        %v201 = vld [vmem:[%s164 + $0x30] sm:$0xff]
        %v202 = vld [vmem:[%s164 + $0x38] sm:$0xff]
        %v203 = vld [vmem:[%s164 + $0x40] sm:$0xff]
        %v204 = vld [vmem:[%s164 + $0x48] sm:$0xff]
        %v205 = vld [vmem:[%s164 + $0x50] sm:$0xff]
        %v206 = vld [vmem:[%s164 + $0x58] sm:$0xff]
        %v207 = vld [vmem:[%s164 + $0x60] sm:$0xff]
        %v208 = vld [vmem:[%s164 + $0x68] sm:$0xff]
        %v209 = vld [vmem:[%s164 + $0x70] sm:$0xff]
        %v210 = vld [vmem:[%s164 + $0x78] sm:$0xff]
        %v211 = vld [vmem:[%s164 + $0x80] sm:$0xff]
        %v212 = vld [vmem:[%s164 + $0x88] sm:$0xff]
        %v213 = vld [vmem:[%s164 + $0x90] sm:$0xff]
        %v214 = vld [vmem:[%s164 + $0x98] sm:$0xff]
        %v215 = vld [vmem:[%s164 + $0xa0] sm:$0xff]
        %v216 = vld [vmem:[%s164 + $0xa8] sm:$0xff]
        %v217 = vld [vmem:[%s164 + $0xb0] sm:$0xff]
        %v218 = vld [vmem:[%s164 + $0xb8] sm:$0xff]
        %v219 = vld [vmem:[%s164 + $0xc0] sm:$0xff]
        %v220 = vld [vmem:[%s164 + $0xc8] sm:$0xff]
        %v221 = vld [vmem:[%s164 + $0xd0] sm:$0xff]
        %v222 = vld [vmem:[%s164 + $0xd8] sm:$0xff]
        %v223 = vld [vmem:[%s164 + $0xe0] sm:$0xff]
        %v224 = vld [vmem:[%s164 + $0xe8] sm:$0xff]
        %v225 = vld [vmem:[%s164 + $0xf0] sm:$0xff]
        %v226 = vld [vmem:[%s164 + $0xf8] sm:$0xff]
        %v227 = vld [vmem:[%s164 + $0x100] sm:$0xff]
        %v228 = vld [vmem:[%s164 + $0x108] sm:$0xff]
        %v229 = vld [vmem:[%s164 + $0x110] sm:$0xff]
        %v230 = vld [vmem:[%s164 + $0x118] sm:$0xff]
        %v231 = vld [vmem:[%s164 + $0x120] sm:$0xff]
        %v232 = vld [vmem:[%s164 + $0x128] sm:$0xff]
        %v233 = vld [vmem:[%s164 + $0x130] sm:$0xff]
        %v234 = vld [vmem:[%s164 + $0x138] sm:$0xff]
        %v235 = vld [vmem:[%s164 + $0x140] sm:$0xff]
        %v236 = vld [vmem:[%s164 + $0x148] sm:$0xff]
        %v237 = vld [vmem:[%s164 + $0x150] sm:$0xff]
        %v238 = vld [vmem:[%s164 + $0x158] sm:$0xff]
        %v239 = vld [vmem:[%s164 + $0x160] sm:$0xff]
        %v240 = vld [vmem:[%s164 + $0x168] sm:$0xff]
        %v241 = vld [vmem:[%s164 + $0x170] sm:$0xff]
        %v242 = vld [vmem:[%s164 + $0x178] sm:$0xff]
        %v243 = vld [vmem:[%s164 + $0x180] sm:$0xff]
        %v244 = vld [vmem:[%s164 + $0x188] sm:$0xff]
        %v245 = vld [vmem:[%s164 + $0x190] sm:$0xff]
        %v246 = vld [vmem:[%s164 + $0x198] sm:$0xff]
        %v247 = vld [vmem:[%s164 + $0x1a0] sm:$0xff]
        %v248 = vld [vmem:[%s164 + $0x1a8] sm:$0xff]
        %v249 = vld [vmem:[%s164 + $0x1b0] sm:$0xff]
        %v250 = vld [vmem:[%s164 + $0x1b8] sm:$0xff]
        %v251 = vld [vmem:[%s164 + $0x1c0] sm:$0xff]
        %v252 = vld [vmem:[%s164 + $0x1c8] sm:$0xff]
        %v253 = vld [vmem:[%s164 + $0x1d0] sm:$0xff]
        %v254 = vld [vmem:[%s164 + $0x1d8] sm:$0xff]
        %v255 = vld [vmem:[%s164 + $0x1e0] sm:$0xff]
        %v256 = vld [vmem:[%s164 + $0x1e8] sm:$0xff]
        %v257 = vld [vmem:[%s164 + $0x1f0] sm:$0xff]
        %v258 = vld [vmem:[%s164 + $0x1f8] sm:$0xff]
        %v259 = vld [vmem:[%s164 + $0x200] sm:$0xff]
        %v260 = vld [vmem:[%s164 + $0x208] sm:$0xff]
        %v261 = vld [vmem:[%s164 + $0x210] sm:$0xff]
        %v262 = vld [vmem:[%s164 + $0x218] sm:$0xff]
        %v263 = vld [vmem:[%s164 + $0x220] sm:$0xff]
        %v264 = vld [vmem:[%s164 + $0x228] sm:$0xff]
        %v265 = vld [vmem:[%s164 + $0x230] sm:$0xff]
        %v266 = vld [vmem:[%s164 + $0x238] sm:$0xff]
        %v267 = vld [vmem:[%s164 + $0x240] sm:$0xff]
        %v268 = vld [vmem:[%s164 + $0x248] sm:$0xff]
        %v269 = vld [vmem:[%s164 + $0x250] sm:$0xff]
        %v270 = vld [vmem:[%s164 + $0x258] sm:$0xff]
        %v271 = vld [vmem:[%s164 + $0x260] sm:$0xff]
        %v272 = vld [vmem:[%s164 + $0x268] sm:$0xff]
        %v273 = vld [vmem:[%s164 + $0x270] sm:$0xff]
        %v274 = vld [vmem:[%s164 + $0x278] sm:$0xff]
        %v275 = vld [vmem:[%s164 + $0x280] sm:$0xff]
        %v276 = vld [vmem:[%s164 + $0x288] sm:$0xff]
        %v277 = vld [vmem:[%s164 + $0x290] sm:$0xff]
        %v278 = vld [vmem:[%s164 + $0x298] sm:$0xff]
        %v279 = vld [vmem:[%s164 + $0x2a0] sm:$0xff]
        %v280 = vld [vmem:[%s164 + $0x2a8] sm:$0xff]
        %v281 = vld [vmem:[%s164 + $0x2b0] sm:$0xff]
        %v282 = vld [vmem:[%s164 + $0x2b8] sm:$0xff]
        %v283 = vld [vmem:[%s164 + $0x2c0] sm:$0xff]
        %v284 = vld [vmem:[%s164 + $0x2c8] sm:$0xff]
        %v285 = vld [vmem:[%s164 + $0x2d0] sm:$0xff]
        %v286 = vld [vmem:[%s164 + $0x2d8] sm:$0xff]
        %v287 = vld [vmem:[%s164 + $0x2e0] sm:$0xff]
        %v288 = vld [vmem:[%s164 + $0x2e8] sm:$0xff]
        %v289 = vld [vmem:[%s164 + $0x2f0] sm:$0xff]
        %v290 = vld [vmem:[%s164 + $0x2f8] sm:$0xff]
        %v291 = vld [vmem:[%s164 + $0x300] sm:$0xff]
        %v292 = vld [vmem:[%s164 + $0x308] sm:$0xff]
        %v293 = vld [vmem:[%s164 + $0x310] sm:$0xff]
        %v294 = vld [vmem:[%s164 + $0x318] sm:$0xff]
        %v295 = vld [vmem:[%s164 + $0x320] sm:$0xff]
        %v296 = vld [vmem:[%s164 + $0x328] sm:$0xff]
        %v297 = vld [vmem:[%s164 + $0x330] sm:$0xff]
        %v298 = vld [vmem:[%s164 + $0x338] sm:$0xff]
        %v299 = vld [vmem:[%s164 + $0x340] sm:$0xff]
        %v300 = vld [vmem:[%s164 + $0x348] sm:$0xff]
        %v301 = vld [vmem:[%s164 + $0x350] sm:$0xff]
        %v302 = vld [vmem:[%s164 + $0x358] sm:$0xff]
        %v303 = vld [vmem:[%s164 + $0x360] sm:$0xff]
        %v304 = vld [vmem:[%s164 + $0x368] sm:$0xff]
        %v305 = vld [vmem:[%s164 + $0x370] sm:$0xff]
        %v306 = vld [vmem:[%s164 + $0x378] sm:$0xff]
        %v307 = vld [vmem:[%s164 + $0x380] sm:$0xff]
        %v308 = vld [vmem:[%s164 + $0x388] sm:$0xff]
        %v309 = vld [vmem:[%s164 + $0x390] sm:$0xff]
        %v310 = vld [vmem:[%s164 + $0x398] sm:$0xff]
        %v311 = vld [vmem:[%s164 + $0x3a0] sm:$0xff]
        %v312 = vld [vmem:[%s164 + $0x3a8] sm:$0xff]
        %v313 = vld [vmem:[%s164 + $0x3b0] sm:$0xff]
        %v314 = vld [vmem:[%s164 + $0x3b8] sm:$0xff]
        %v315 = vld [vmem:[%s164 + $0x3c0] sm:$0xff]
        %v316 = vld [vmem:[%s164 + $0x3c8] sm:$0xff]
        %v317 = vld [vmem:[%s164 + $0x3d0] sm:$0xff]
        %v318 = vld [vmem:[%s164 + $0x3d8] sm:$0xff]
        %v319 = vld [vmem:[%s164 + $0x3e0] sm:$0xff]
        %v320 = vld [vmem:[%s164 + $0x3e8] sm:$0xff]
        %v321 = vld [vmem:[%s164 + $0x3f0] sm:$0xff]
        %v322 = vld [vmem:[%s164 + $0x3f8] sm:$0xff]
        %v323 = vld [vmem:[%s1] sm:$0xf]
        %v324 = vld [vmem:[%s1 + $0x4] sm:$0xf]
        %v325 = vld [vmem:[%s1 + $0x8] sm:$0xf]
        %v326 = vld [vmem:[%s1 + $0xc] sm:$0xf]
        %v327 = vld [vmem:[%s1 + $0x10] sm:$0xf]
        %v328 = vld [vmem:[%s1 + $0x14] sm:$0xf]
        %v329 = vld [vmem:[%s1 + $0x18] sm:$0xf]
        %v330 = vld [vmem:[%s1 + $0x1c] sm:$0xf]
        %v331 = vld [vmem:[%s1 + $0x20] sm:$0xf]
        %v332 = vld [vmem:[%s1 + $0x24] sm:$0xf]
        %v333 = vld [vmem:[%s1 + $0x28] sm:$0xf]
        %v334 = vld [vmem:[%s1 + $0x2c] sm:$0xf]
        %v335 = vld [vmem:[%s1 + $0x30] sm:$0xf]
        %v336 = vld [vmem:[%s1 + $0x34] sm:$0xf]
        %v337 = vld [vmem:[%s1 + $0x38] sm:$0xf]
        %v338 = vld [vmem:[%s1 + $0x3c] sm:$0xf]
        %v339 = vld [vmem:[%s1 + $0x40] sm:$0xf]
        %v340 = vld [vmem:[%s1 + $0x44] sm:$0xf]
        %v341 = vld [vmem:[%s1 + $0x48] sm:$0xf]
        %v342 = vld [vmem:[%s1 + $0x4c] sm:$0xf]
        %v343 = vld [vmem:[%s1 + $0x50] sm:$0xf]
        %v344 = vld [vmem:[%s1 + $0x54] sm:$0xf]
        %v345 = vld [vmem:[%s1 + $0x58] sm:$0xf]
        %v346 = vld [vmem:[%s1 + $0x5c] sm:$0xf]
        %v347 = vld [vmem:[%s1 + $0x60] sm:$0xf]
        %v348 = vld [vmem:[%s1 + $0x64] sm:$0xf]
        %v349 = vld [vmem:[%s1 + $0x68] sm:$0xf]
        %v350 = vld [vmem:[%s1 + $0x6c] sm:$0xf]
        %v351 = vld [vmem:[%s1 + $0x70] sm:$0xf]
        %v352 = vld [vmem:[%s1 + $0x74] sm:$0xf]
        %v353 = vld [vmem:[%s1 + $0x78] sm:$0xf]
        %v354 = vld [vmem:[%s1 + $0x7c] sm:$0xf]
        %v355 = vld [vmem:[%s2] sm:$0x1]
        %v357 = vlaneseq
        %v358 = vshrl.u32 %v357, 7
        %v359 = vsub.s32 0, %v358
        %v360 = vrot.slane %v355, %v359
        %v490 = vunpack.c.l.b16 %v195
        %v491 = vunpack.c.h.b16 %v195
        %v492 = vunpack.c.l.b16 %v196
        %v493 = vunpack.c.h.b16 %v196
        %v494 = vunpack.c.l.b16 %v197
        %v495 = vunpack.c.h.b16 %v197
        %v496 = vunpack.c.l.b16 %v198
        %v497 = vunpack.c.h.b16 %v198
        %v498 = vunpack.c.l.b16 %v199
        %v499 = vunpack.c.h.b16 %v199
        %v500 = vunpack.c.l.b16 %v200
        %v501 = vunpack.c.h.b16 %v200
        %v502 = vunpack.c.l.b16 %v201
        %v503 = vunpack.c.h.b16 %v201
        %v504 = vunpack.c.l.b16 %v202
        %v505 = vunpack.c.h.b16 %v202
        %v506 = vunpack.c.l.b16 %v203
        %v507 = vunpack.c.h.b16 %v203
        %v508 = vunpack.c.l.b16 %v204
        %v509 = vunpack.c.h.b16 %v204
        %v510 = vunpack.c.l.b16 %v205
        %v511 = vunpack.c.h.b16 %v205
        %v512 = vunpack.c.l.b16 %v206
        %v513 = vunpack.c.h.b16 %v206
        %v514 = vunpack.c.l.b16 %v207
        %v515 = vunpack.c.h.b16 %v207
        %v516 = vunpack.c.l.b16 %v208
        %v517 = vunpack.c.h.b16 %v208
        %v518 = vunpack.c.l.b16 %v209
        %v519 = vunpack.c.h.b16 %v209
        %v520 = vunpack.c.l.b16 %v210
        %v521 = vunpack.c.h.b16 %v210
        %v522 = vunpack.c.l.b16 %v211
        %v523 = vunpack.c.h.b16 %v211
        %v524 = vunpack.c.l.b16 %v212
        %v525 = vunpack.c.h.b16 %v212
        %v526 = vunpack.c.l.b16 %v213
        %v527 = vunpack.c.h.b16 %v213
        %v528 = vunpack.c.l.b16 %v214
        %v529 = vunpack.c.h.b16 %v214
        %v530 = vunpack.c.l.b16 %v215
        %v531 = vunpack.c.h.b16 %v215
        %v532 = vunpack.c.l.b16 %v216
        %v533 = vunpack.c.h.b16 %v216
        %v534 = vunpack.c.l.b16 %v217
        %v535 = vunpack.c.h.b16 %v217
        %v536 = vunpack.c.l.b16 %v218
        %v537 = vunpack.c.h.b16 %v218
        %v538 = vunpack.c.l.b16 %v219
        %v539 = vunpack.c.h.b16 %v219
        %v540 = vunpack.c.l.b16 %v220
        %v541 = vunpack.c.h.b16 %v220
        %v542 = vunpack.c.l.b16 %v221
        %v543 = vunpack.c.h.b16 %v221
        %v544 = vunpack.c.l.b16 %v222
        %v545 = vunpack.c.h.b16 %v222
        %v546 = vunpack.c.l.b16 %v223
        %v547 = vunpack.c.h.b16 %v223
        %v548 = vunpack.c.l.b16 %v224
        %v549 = vunpack.c.h.b16 %v224
        %v550 = vunpack.c.l.b16 %v225
        %v551 = vunpack.c.h.b16 %v225
        %v552 = vunpack.c.l.b16 %v226
        %v553 = vunpack.c.h.b16 %v226
        %v554 = vunpack.c.l.b16 %v227
        %v555 = vunpack.c.h.b16 %v227
        %v556 = vunpack.c.l.b16 %v228
        %v557 = vunpack.c.h.b16 %v228
        %v558 = vunpack.c.l.b16 %v229
        %v559 = vunpack.c.h.b16 %v229
        %v560 = vunpack.c.l.b16 %v230
        %v561 = vunpack.c.h.b16 %v230
        %v562 = vunpack.c.l.b16 %v231
        %v563 = vunpack.c.h.b16 %v231
        %v564 = vunpack.c.l.b16 %v232
        %v565 = vunpack.c.h.b16 %v232
        %v566 = vunpack.c.l.b16 %v233
        %v567 = vunpack.c.h.b16 %v233
        %v568 = vunpack.c.l.b16 %v234
        %v569 = vunpack.c.h.b16 %v234
        %v570 = vunpack.c.l.b16 %v235
        %v571 = vunpack.c.h.b16 %v235
        %v572 = vunpack.c.l.b16 %v236
        %v573 = vunpack.c.h.b16 %v236
        %v574 = vunpack.c.l.b16 %v237
        %v575 = vunpack.c.h.b16 %v237
        %v576 = vunpack.c.l.b16 %v238
        %v577 = vunpack.c.h.b16 %v238
        %v578 = vunpack.c.l.b16 %v239
        %v579 = vunpack.c.h.b16 %v239
        %v580 = vunpack.c.l.b16 %v240
        %v581 = vunpack.c.h.b16 %v240
        %v582 = vunpack.c.l.b16 %v241
        %v583 = vunpack.c.h.b16 %v241
        %v584 = vunpack.c.l.b16 %v242
        %v585 = vunpack.c.h.b16 %v242
        %v586 = vunpack.c.l.b16 %v243
        %v587 = vunpack.c.h.b16 %v243
        %v588 = vunpack.c.l.b16 %v244
        %v589 = vunpack.c.h.b16 %v244
        %v590 = vunpack.c.l.b16 %v245
        %v591 = vunpack.c.h.b16 %v245
        %v592 = vunpack.c.l.b16 %v246
        %v593 = vunpack.c.h.b16 %v246
        %v594 = vunpack.c.l.b16 %v247
        %v595 = vunpack.c.h.b16 %v247
        %v596 = vunpack.c.l.b16 %v248
        %v597 = vunpack.c.h.b16 %v248
        %v598 = vunpack.c.l.b16 %v249
        %v599 = vunpack.c.h.b16 %v249
        %v600 = vunpack.c.l.b16 %v250
        %v601 = vunpack.c.h.b16 %v250
        %v602 = vunpack.c.l.b16 %v251
        %v603 = vunpack.c.h.b16 %v251
        %v604 = vunpack.c.l.b16 %v252
        %v605 = vunpack.c.h.b16 %v252
        %v606 = vunpack.c.l.b16 %v253
        %v607 = vunpack.c.h.b16 %v253
        %v608 = vunpack.c.l.b16 %v254
        %v609 = vunpack.c.h.b16 %v254
        %v610 = vunpack.c.l.b16 %v255
        %v611 = vunpack.c.h.b16 %v255
        %v612 = vunpack.c.l.b16 %v256
        %v613 = vunpack.c.h.b16 %v256
        %v614 = vunpack.c.l.b16 %v257
        %v615 = vunpack.c.h.b16 %v257
        %v616 = vunpack.c.l.b16 %v258
        %v617 = vunpack.c.h.b16 %v258
        %v618 = vunpack.c.l.b16 %v259
        %v619 = vunpack.c.h.b16 %v259
        %v620 = vunpack.c.l.b16 %v260
        %v621 = vunpack.c.h.b16 %v260
        %v622 = vunpack.c.l.b16 %v261
        %v623 = vunpack.c.h.b16 %v261
        %v624 = vunpack.c.l.b16 %v262
        %v625 = vunpack.c.h.b16 %v262
        %v626 = vunpack.c.l.b16 %v263
        %v627 = vunpack.c.h.b16 %v263
        %v628 = vunpack.c.l.b16 %v264
        %v629 = vunpack.c.h.b16 %v264
        %v630 = vunpack.c.l.b16 %v265
        %v631 = vunpack.c.h.b16 %v265
        %v632 = vunpack.c.l.b16 %v266
        %v633 = vunpack.c.h.b16 %v266
        %v634 = vunpack.c.l.b16 %v267
        %v635 = vunpack.c.h.b16 %v267
        %v636 = vunpack.c.l.b16 %v268
        %v637 = vunpack.c.h.b16 %v268
        %v638 = vunpack.c.l.b16 %v269
        %v639 = vunpack.c.h.b16 %v269
        %v640 = vunpack.c.l.b16 %v270
        %v641 = vunpack.c.h.b16 %v270
        %v642 = vunpack.c.l.b16 %v271
        %v643 = vunpack.c.h.b16 %v271
        %v644 = vunpack.c.l.b16 %v272
        %v645 = vunpack.c.h.b16 %v272
        %v646 = vunpack.c.l.b16 %v273
        %v647 = vunpack.c.h.b16 %v273
        %v648 = vunpack.c.l.b16 %v274
        %v649 = vunpack.c.h.b16 %v274
        %v650 = vunpack.c.l.b16 %v275
        %v651 = vunpack.c.h.b16 %v275
        %v652 = vunpack.c.l.b16 %v276
        %v653 = vunpack.c.h.b16 %v276
        %v654 = vunpack.c.l.b16 %v277
        %v655 = vunpack.c.h.b16 %v277
        %v656 = vunpack.c.l.b16 %v278
        %v657 = vunpack.c.h.b16 %v278
        %v658 = vunpack.c.l.b16 %v279
        %v659 = vunpack.c.h.b16 %v279
        %v660 = vunpack.c.l.b16 %v280
        %v661 = vunpack.c.h.b16 %v280
        %v662 = vunpack.c.l.b16 %v281
        %v663 = vunpack.c.h.b16 %v281
        %v664 = vunpack.c.l.b16 %v282
        %v665 = vunpack.c.h.b16 %v282
        %v666 = vunpack.c.l.b16 %v283
        %v667 = vunpack.c.h.b16 %v283
        %v668 = vunpack.c.l.b16 %v284
        %v669 = vunpack.c.h.b16 %v284
        %v670 = vunpack.c.l.b16 %v285
        %v671 = vunpack.c.h.b16 %v285
        %v672 = vunpack.c.l.b16 %v286
        %v673 = vunpack.c.h.b16 %v286
        %v674 = vunpack.c.l.b16 %v287
        %v675 = vunpack.c.h.b16 %v287
        %v676 = vunpack.c.l.b16 %v288
        %v677 = vunpack.c.h.b16 %v288
        %v678 = vunpack.c.l.b16 %v289
        %v679 = vunpack.c.h.b16 %v289
        %v680 = vunpack.c.l.b16 %v290
        %v681 = vunpack.c.h.b16 %v290
        %v682 = vunpack.c.l.b16 %v291
        %v683 = vunpack.c.h.b16 %v291
        %v684 = vunpack.c.l.b16 %v292
        %v685 = vunpack.c.h.b16 %v292
        %v686 = vunpack.c.l.b16 %v293
        %v687 = vunpack.c.h.b16 %v293
        %v688 = vunpack.c.l.b16 %v294
        %v689 = vunpack.c.h.b16 %v294
        %v690 = vunpack.c.l.b16 %v295
        %v691 = vunpack.c.h.b16 %v295
        %v692 = vunpack.c.l.b16 %v296
        %v693 = vunpack.c.h.b16 %v296
        %v694 = vunpack.c.l.b16 %v297
        %v695 = vunpack.c.h.b16 %v297
        %v696 = vunpack.c.l.b16 %v298
        %v697 = vunpack.c.h.b16 %v298
        %v698 = vunpack.c.l.b16 %v299
        %v699 = vunpack.c.h.b16 %v299
        %v700 = vunpack.c.l.b16 %v300
        %v701 = vunpack.c.h.b16 %v300
        %v702 = vunpack.c.l.b16 %v301
        %v703 = vunpack.c.h.b16 %v301
        %v704 = vunpack.c.l.b16 %v302
        %v705 = vunpack.c.h.b16 %v302
        %v706 = vunpack.c.l.b16 %v303
        %v707 = vunpack.c.h.b16 %v303
        %v708 = vunpack.c.l.b16 %v304
        %v709 = vunpack.c.h.b16 %v304
        %v710 = vunpack.c.l.b16 %v305
        %v711 = vunpack.c.h.b16 %v305
        %v712 = vunpack.c.l.b16 %v306
        %v713 = vunpack.c.h.b16 %v306
        %v714 = vunpack.c.l.b16 %v307
        %v715 = vunpack.c.h.b16 %v307
        %v716 = vunpack.c.l.b16 %v308
        %v717 = vunpack.c.h.b16 %v308
        %v718 = vunpack.c.l.b16 %v309
        %v719 = vunpack.c.h.b16 %v309
        %v720 = vunpack.c.l.b16 %v310
        %v721 = vunpack.c.h.b16 %v310
        %v722 = vunpack.c.l.b16 %v311
        %v723 = vunpack.c.h.b16 %v311
        %v724 = vunpack.c.l.b16 %v312
        %v725 = vunpack.c.h.b16 %v312
        %v726 = vunpack.c.l.b16 %v313
        %v727 = vunpack.c.h.b16 %v313
        %v728 = vunpack.c.l.b16 %v314
        %v729 = vunpack.c.h.b16 %v314
        %v730 = vunpack.c.l.b16 %v315
        %v731 = vunpack.c.h.b16 %v315
        %v732 = vunpack.c.l.b16 %v316
        %v733 = vunpack.c.h.b16 %v316
        %v734 = vunpack.c.l.b16 %v317
        %v735 = vunpack.c.h.b16 %v317
        %v736 = vunpack.c.l.b16 %v318
        %v737 = vunpack.c.h.b16 %v318
        %v738 = vunpack.c.l.b16 %v319
        %v739 = vunpack.c.h.b16 %v319
        %v740 = vunpack.c.l.b16 %v320
        %v741 = vunpack.c.h.b16 %v320
        %v742 = vunpack.c.l.b16 %v321
        %v743 = vunpack.c.h.b16 %v321
        %v744 = vunpack.c.l.b16 %v322
        %v745 = vunpack.c.h.b16 %v322
        %v746 = vpack.c.b16 %v492, %v490
        %v747 = vpack.c.b16 %v493, %v491
        %v748 = vpack.c.b16 %v496, %v494
        %v749 = vpack.c.b16 %v497, %v495
        %v750 = vpack.c.b16 %v500, %v498
        %v751 = vpack.c.b16 %v501, %v499
        %v752 = vpack.c.b16 %v504, %v502
        %v753 = vpack.c.b16 %v505, %v503
        %v754 = vpack.c.b16 %v508, %v506
        %v755 = vpack.c.b16 %v509, %v507
        %v756 = vpack.c.b16 %v512, %v510
        %v757 = vpack.c.b16 %v513, %v511
        %v758 = vpack.c.b16 %v516, %v514
        %v759 = vpack.c.b16 %v517, %v515
        %v760 = vpack.c.b16 %v520, %v518
        %v761 = vpack.c.b16 %v521, %v519
        %v762 = vpack.c.b16 %v524, %v522
        %v763 = vpack.c.b16 %v525, %v523
        %v764 = vpack.c.b16 %v528, %v526
        %v765 = vpack.c.b16 %v529, %v527
        %v766 = vpack.c.b16 %v532, %v530
        %v767 = vpack.c.b16 %v533, %v531
        %v768 = vpack.c.b16 %v536, %v534
        %v769 = vpack.c.b16 %v537, %v535
        %v770 = vpack.c.b16 %v540, %v538
        %v771 = vpack.c.b16 %v541, %v539
        %v772 = vpack.c.b16 %v544, %v542
        %v773 = vpack.c.b16 %v545, %v543
        %v774 = vpack.c.b16 %v548, %v546
        %v775 = vpack.c.b16 %v549, %v547
        %v776 = vpack.c.b16 %v552, %v550
        %v777 = vpack.c.b16 %v553, %v551
        %v778 = vpack.c.b16 %v556, %v554
        %v779 = vpack.c.b16 %v557, %v555
        %v780 = vpack.c.b16 %v560, %v558
        %v781 = vpack.c.b16 %v561, %v559
        %v782 = vpack.c.b16 %v564, %v562
        %v783 = vpack.c.b16 %v565, %v563
        %v784 = vpack.c.b16 %v568, %v566
        %v785 = vpack.c.b16 %v569, %v567
        %v786 = vpack.c.b16 %v572, %v570
        %v787 = vpack.c.b16 %v573, %v571
        %v788 = vpack.c.b16 %v576, %v574
        %v789 = vpack.c.b16 %v577, %v575
        %v790 = vpack.c.b16 %v580, %v578
        %v791 = vpack.c.b16 %v581, %v579
        %v792 = vpack.c.b16 %v584, %v582
        %v793 = vpack.c.b16 %v585, %v583
        %v794 = vpack.c.b16 %v588, %v586
        %v795 = vpack.c.b16 %v589, %v587
        %v796 = vpack.c.b16 %v592, %v590
        %v797 = vpack.c.b16 %v593, %v591
        %v798 = vpack.c.b16 %v596, %v594
        %v799 = vpack.c.b16 %v597, %v595
        %v800 = vpack.c.b16 %v600, %v598
        %v801 = vpack.c.b16 %v601, %v599
        %v802 = vpack.c.b16 %v604, %v602
        %v803 = vpack.c.b16 %v605, %v603
        %v804 = vpack.c.b16 %v608, %v606
        %v805 = vpack.c.b16 %v609, %v607
        %v806 = vpack.c.b16 %v612, %v610
        %v807 = vpack.c.b16 %v613, %v611
        %v808 = vpack.c.b16 %v616, %v614
        %v809 = vpack.c.b16 %v617, %v615
        %v810 = vpack.c.b16 %v620, %v618
        %v811 = vpack.c.b16 %v621, %v619
        %v812 = vpack.c.b16 %v624, %v622
        %v813 = vpack.c.b16 %v625, %v623
        %v814 = vpack.c.b16 %v628, %v626
        %v815 = vpack.c.b16 %v629, %v627
        %v816 = vpack.c.b16 %v632, %v630
        %v817 = vpack.c.b16 %v633, %v631
        %v818 = vpack.c.b16 %v636, %v634
        %v819 = vpack.c.b16 %v637, %v635
        %v820 = vpack.c.b16 %v640, %v638
        %v821 = vpack.c.b16 %v641, %v639
        %v822 = vpack.c.b16 %v644, %v642
        %v823 = vpack.c.b16 %v645, %v643
        %v824 = vpack.c.b16 %v648, %v646
        %v825 = vpack.c.b16 %v649, %v647
        %v826 = vpack.c.b16 %v652, %v650
        %v827 = vpack.c.b16 %v653, %v651
        %v828 = vpack.c.b16 %v656, %v654
        %v829 = vpack.c.b16 %v657, %v655
        %v830 = vpack.c.b16 %v660, %v658
        %v831 = vpack.c.b16 %v661, %v659
        %v832 = vpack.c.b16 %v664, %v662
        %v833 = vpack.c.b16 %v665, %v663
        %v834 = vpack.c.b16 %v668, %v666
        %v835 = vpack.c.b16 %v669, %v667
        %v836 = vpack.c.b16 %v672, %v670
        %v837 = vpack.c.b16 %v673, %v671
        %v838 = vpack.c.b16 %v676, %v674
        %v839 = vpack.c.b16 %v677, %v675
        %v840 = vpack.c.b16 %v680, %v678
        %v841 = vpack.c.b16 %v681, %v679
        %v842 = vpack.c.b16 %v684, %v682
        %v843 = vpack.c.b16 %v685, %v683
        %v844 = vpack.c.b16 %v688, %v686
        %v845 = vpack.c.b16 %v689, %v687
        %v846 = vpack.c.b16 %v692, %v690
        %v847 = vpack.c.b16 %v693, %v691
        %v848 = vpack.c.b16 %v696, %v694
        %v849 = vpack.c.b16 %v697, %v695
        %v850 = vpack.c.b16 %v700, %v698
        %v851 = vpack.c.b16 %v701, %v699
        %v852 = vpack.c.b16 %v704, %v702
        %v853 = vpack.c.b16 %v705, %v703
        %v854 = vpack.c.b16 %v708, %v706
        %v855 = vpack.c.b16 %v709, %v707
        %v856 = vpack.c.b16 %v712, %v710
        %v857 = vpack.c.b16 %v713, %v711
        %v858 = vpack.c.b16 %v716, %v714
        %v859 = vpack.c.b16 %v717, %v715
        %v860 = vpack.c.b16 %v720, %v718
        %v861 = vpack.c.b16 %v721, %v719
        %v862 = vpack.c.b16 %v724, %v722
        %v863 = vpack.c.b16 %v725, %v723
        %v864 = vpack.c.b16 %v728, %v726
        %v865 = vpack.c.b16 %v729, %v727
        %v866 = vpack.c.b16 %v732, %v730
        %v867 = vpack.c.b16 %v733, %v731
        %v868 = vpack.c.b16 %v736, %v734
        %v869 = vpack.c.b16 %v737, %v735
        %v870 = vpack.c.b16 %v740, %v738
        %v871 = vpack.c.b16 %v741, %v739
        %v872 = vpack.c.b16 %v744, %v742
        %v873 = vpack.c.b16 %v745, %v743
        %v1034 = vunpack.c.l.b16 %v323
        %v1035 = vunpack.c.l.b16 %v324
        %v1036 = vunpack.c.l.b16 %v325
        %v1037 = vunpack.c.l.b16 %v326
        %v1038 = vunpack.c.l.b16 %v327
        %v1039 = vunpack.c.l.b16 %v328
        %v1040 = vunpack.c.l.b16 %v329
        %v1041 = vunpack.c.l.b16 %v330
        %v1042 = vunpack.c.l.b16 %v331
        %v1043 = vunpack.c.l.b16 %v332
        %v1044 = vunpack.c.l.b16 %v333
        %v1045 = vunpack.c.l.b16 %v334
        %v1046 = vunpack.c.l.b16 %v335
        %v1047 = vunpack.c.l.b16 %v336
        %v1048 = vunpack.c.l.b16 %v337
        %v1049 = vunpack.c.l.b16 %v338
        %v1050 = vunpack.c.l.b16 %v339
        %v1051 = vunpack.c.l.b16 %v340
        %v1052 = vunpack.c.l.b16 %v341
        %v1053 = vunpack.c.l.b16 %v342
        %v1054 = vunpack.c.l.b16 %v343
        %v1055 = vunpack.c.l.b16 %v344
        %v1056 = vunpack.c.l.b16 %v345
        %v1057 = vunpack.c.l.b16 %v346
        %v1058 = vunpack.c.l.b16 %v347
        %v1059 = vunpack.c.l.b16 %v348
        %v1060 = vunpack.c.l.b16 %v349
        %v1061 = vunpack.c.l.b16 %v350
        %v1062 = vunpack.c.l.b16 %v351
        %v1063 = vunpack.c.l.b16 %v352
        %v1064 = vunpack.c.l.b16 %v353
        %v1065 = vunpack.c.l.b16 %v354
        %v1066 = vpack.c.b16 %v1035, %v1034
        %v1067 = vpack.c.b16 %v1037, %v1036
        %v1068 = vpack.c.b16 %v1039, %v1038
        %v1069 = vpack.c.b16 %v1041, %v1040
        %v1070 = vpack.c.b16 %v1043, %v1042
        %v1071 = vpack.c.b16 %v1045, %v1044
        %v1072 = vpack.c.b16 %v1047, %v1046
        %v1073 = vpack.c.b16 %v1049, %v1048
        %v1074 = vpack.c.b16 %v1051, %v1050
        %v1075 = vpack.c.b16 %v1053, %v1052
        %v1076 = vpack.c.b16 %v1055, %v1054
        %v1077 = vpack.c.b16 %v1057, %v1056
        %v1078 = vpack.c.b16 %v1059, %v1058
        %v1079 = vpack.c.b16 %v1061, %v1060
        %v1080 = vpack.c.b16 %v1063, %v1062
        %v1081 = vpack.c.b16 %v1065, %v1064
        %1098 = vmatprep.subr.bf16.mxu0 0
        %1099 = vmatpush1.bf16.msra.mxu0 %v1073
        %1100 = vmatprep.subr.bf16.mxu0 0
        %1101 = vmatpush1.bf16.msra.mxu0 %v1072
        %1102 = vmatprep.subr.bf16.mxu0 0
        %1103 = vmatpush1.bf16.msra.mxu0 %v1071
        %1104 = vmatprep.subr.bf16.mxu0 0
        %1105 = vmatpush1.bf16.msra.mxu0 %v1070
        %1106 = vmatprep.subr.bf16.mxu0 0
        %1107 = vmatpush1.bf16.msra.mxu0 %v1069
        %1108 = vmatprep.subr.bf16.mxu0 0
        %1109 = vmatpush1.bf16.msra.mxu0 %v1068
        %1110 = vmatprep.subr.bf16.mxu0 0
        %1111 = vmatpush1.bf16.msra.mxu0 %v1067
        %1112 = vmatprep.subr.bf16.mxu0 0
        %1113 = vmatpush1.bf16.msra.mxu0 %v1066
        %1114 = vmatprep.subr.bf16.mxu0 0
        %1115 = vmatpush2.bf16.msra.mxu0 %v1081
        %1116 = vmatprep.subr.bf16.mxu0 0
        %1117 = vmatpush2.bf16.msra.mxu0 %v1080
        %1118 = vmatprep.subr.bf16.mxu0 0
        %1119 = vmatpush2.bf16.msra.mxu0 %v1079
        %1120 = vmatprep.subr.bf16.mxu0 0
        %1121 = vmatpush2.bf16.msra.mxu0 %v1078
        %1122 = vmatprep.subr.bf16.mxu0 0
        %1123 = vmatpush2.bf16.msra.mxu0 %v1077
        %1124 = vmatprep.subr.bf16.mxu0 0
        %1125 = vmatpush2.bf16.msra.mxu0 %v1076
        %1126 = vmatprep.subr.bf16.mxu0 0
        %1127 = vmatpush2.bf16.msra.mxu0 %v1075
        %1128 = vmatprep.subr.bf16.mxu0 0
        %1129 = vmatpush2.bf16.msra.mxu0 %v1074
        %1130 = vmatprep.mubr.bf16.mxu0 %v747
        %1131 = vmatmul.mubr.bf16.gmra.mxu0 %v746
        %v1132 = vpop.f32.mrf.mxu0
        %v1133 = vadd.f32 %v360, %v1132
        %v1134 = vpop.f32.mrf.mxu0
        %v1135 = vpop.f32.mrf.mxu0
        %v1136 = vadd.f32 %v360, %v1135
        %v1137 = vpop.f32.mrf.mxu0
        %1138 = vmatprep.mubr.bf16.mxu0 %v749
        %1139 = vmatmul.mubr.bf16.gmra.mxu0 %v748
        %v1140 = vpop.f32.mrf.mxu0
        %v1141 = vadd.f32 %v360, %v1140
        %v1142 = vpop.f32.mrf.mxu0
        %v1143 = vpop.f32.mrf.mxu0
        %v1144 = vadd.f32 %v360, %v1143
        %v1145 = vpop.f32.mrf.mxu0
        %1146 = vmatprep.mubr.bf16.mxu0 %v751
        %1147 = vmatmul.mubr.bf16.gmra.mxu0 %v750
        %v1148 = vpop.f32.mrf.mxu0
        %v1149 = vadd.f32 %v360, %v1148
        %v1150 = vpop.f32.mrf.mxu0
        %v1151 = vpop.f32.mrf.mxu0
        %v1152 = vadd.f32 %v360, %v1151
        %v1153 = vpop.f32.mrf.mxu0
        %1154 = vmatprep.mubr.bf16.mxu0 %v753
        %1155 = vmatmul.mubr.bf16.gmra.mxu0 %v752
        %v1156 = vpop.f32.mrf.mxu0
        %v1157 = vadd.f32 %v360, %v1156
        %v1158 = vpop.f32.mrf.mxu0
        %v1159 = vpop.f32.mrf.mxu0
        %v1160 = vadd.f32 %v360, %v1159
        %v1161 = vpop.f32.mrf.mxu0
        %1162 = vmatprep.mubr.bf16.mxu0 %v755
        %1163 = vmatmul.mubr.bf16.gmra.mxu0 %v754
        %v1164 = vpop.f32.mrf.mxu0
        %v1165 = vadd.f32 %v360, %v1164
        %v1166 = vpop.f32.mrf.mxu0
        %v1167 = vpop.f32.mrf.mxu0
        %v1168 = vadd.f32 %v360, %v1167
        %v1169 = vpop.f32.mrf.mxu0
        %1170 = vmatprep.mubr.bf16.mxu0 %v757
        %1171 = vmatmul.mubr.bf16.gmra.mxu0 %v756
        %v1172 = vpop.f32.mrf.mxu0
        %v1173 = vadd.f32 %v360, %v1172
        %v1174 = vpop.f32.mrf.mxu0
        %v1175 = vpop.f32.mrf.mxu0
        %v1176 = vadd.f32 %v360, %v1175
        %v1177 = vpop.f32.mrf.mxu0
        %1178 = vmatprep.mubr.bf16.mxu0 %v759
        %1179 = vmatmul.mubr.bf16.gmra.mxu0 %v758
        %v1180 = vpop.f32.mrf.mxu0
        %v1181 = vadd.f32 %v360, %v1180
        %v1182 = vpop.f32.mrf.mxu0
        %v1183 = vpop.f32.mrf.mxu0
        %v1184 = vadd.f32 %v360, %v1183
        %v1185 = vpop.f32.mrf.mxu0
        %1186 = vmatprep.mubr.bf16.mxu0 %v761
        %1187 = vmatmul.mubr.bf16.gmra.mxu0 %v760
        %v1188 = vpop.f32.mrf.mxu0
        %v1189 = vadd.f32 %v360, %v1188
        %v1190 = vpop.f32.mrf.mxu0
        %v1191 = vpop.f32.mrf.mxu0
        %v1192 = vadd.f32 %v360, %v1191
        %v1193 = vpop.f32.mrf.mxu0
        %1194 = vmatprep.mubr.bf16.mxu0 %v763
        %1195 = vmatmul.mubr.bf16.gmra.mxu0 %v762
        %v1196 = vpop.f32.mrf.mxu0
        %v1197 = vadd.f32 %v360, %v1196
        %v1198 = vpop.f32.mrf.mxu0
        %v1199 = vpop.f32.mrf.mxu0
        %v1200 = vadd.f32 %v360, %v1199
        %v1201 = vpop.f32.mrf.mxu0
        %1202 = vmatprep.mubr.bf16.mxu0 %v765
        %1203 = vmatmul.mubr.bf16.gmra.mxu0 %v764
        %v1204 = vpop.f32.mrf.mxu0
        %v1205 = vadd.f32 %v360, %v1204
        %v1206 = vpop.f32.mrf.mxu0
        %v1207 = vpop.f32.mrf.mxu0
        %v1208 = vadd.f32 %v360, %v1207
        %v1209 = vpop.f32.mrf.mxu0
        %1210 = vmatprep.mubr.bf16.mxu0 %v767
        %1211 = vmatmul.mubr.bf16.gmra.mxu0 %v766
        %v1212 = vpop.f32.mrf.mxu0
        %v1213 = vadd.f32 %v360, %v1212
        %v1214 = vpop.f32.mrf.mxu0
        %v1215 = vpop.f32.mrf.mxu0
        %v1216 = vadd.f32 %v360, %v1215
        %v1217 = vpop.f32.mrf.mxu0
        %1218 = vmatprep.mubr.bf16.mxu0 %v769
        %1219 = vmatmul.mubr.bf16.gmra.mxu0 %v768
        %v1220 = vpop.f32.mrf.mxu0
        %v1221 = vadd.f32 %v360, %v1220
        %v1222 = vpop.f32.mrf.mxu0
        %v1223 = vpop.f32.mrf.mxu0
        %v1224 = vadd.f32 %v360, %v1223
        %v1225 = vpop.f32.mrf.mxu0
        %1226 = vmatprep.mubr.bf16.mxu0 %v771
        %1227 = vmatmul.mubr.bf16.gmra.mxu0 %v770
        %v1228 = vpop.f32.mrf.mxu0
        %v1229 = vadd.f32 %v360, %v1228
        %v1230 = vpop.f32.mrf.mxu0
        %v1231 = vpop.f32.mrf.mxu0
        %v1232 = vadd.f32 %v360, %v1231
        %v1233 = vpop.f32.mrf.mxu0
        %1234 = vmatprep.mubr.bf16.mxu0 %v773
        %1235 = vmatmul.mubr.bf16.gmra.mxu0 %v772
        %v1236 = vpop.f32.mrf.mxu0
        %v1237 = vadd.f32 %v360, %v1236
        %v1238 = vpop.f32.mrf.mxu0
        %v1239 = vpop.f32.mrf.mxu0
        %v1240 = vadd.f32 %v360, %v1239
        %v1241 = vpop.f32.mrf.mxu0
        %1242 = vmatprep.mubr.bf16.mxu0 %v775
        %1243 = vmatmul.mubr.bf16.gmra.mxu0 %v774
        %v1244 = vpop.f32.mrf.mxu0
        %v1245 = vadd.f32 %v360, %v1244
        %v1246 = vpop.f32.mrf.mxu0
        %v1247 = vpop.f32.mrf.mxu0
        %v1248 = vadd.f32 %v360, %v1247
        %v1249 = vpop.f32.mrf.mxu0
        %1250 = vmatprep.mubr.bf16.mxu0 %v777
        %1251 = vmatmul.mubr.bf16.gmra.mxu0 %v776
        %v1252 = vpop.f32.mrf.mxu0
        %v1253 = vadd.f32 %v360, %v1252
        %v1254 = vpop.f32.mrf.mxu0
        %v1255 = vpop.f32.mrf.mxu0
        %v1256 = vadd.f32 %v360, %v1255
        %v1257 = vpop.f32.mrf.mxu0
        %1258 = vmatprep.mubr.bf16.mxu0 %v779
        %1259 = vmatmul.mubr.bf16.gmra.mxu0 %v778
        %v1260 = vpop.f32.mrf.mxu0
        %v1261 = vadd.f32 %v360, %v1260
        %v1262 = vpop.f32.mrf.mxu0
        %v1263 = vpop.f32.mrf.mxu0
        %v1264 = vadd.f32 %v360, %v1263
        %v1265 = vpop.f32.mrf.mxu0
        %1266 = vmatprep.mubr.bf16.mxu0 %v781
        %1267 = vmatmul.mubr.bf16.gmra.mxu0 %v780
        %v1268 = vpop.f32.mrf.mxu0
        %v1269 = vadd.f32 %v360, %v1268
        %v1270 = vpop.f32.mrf.mxu0
        %v1271 = vpop.f32.mrf.mxu0
        %v1272 = vadd.f32 %v360, %v1271
        %v1273 = vpop.f32.mrf.mxu0
        %1274 = vmatprep.mubr.bf16.mxu0 %v783
        %1275 = vmatmul.mubr.bf16.gmra.mxu0 %v782
        %v1276 = vpop.f32.mrf.mxu0
        %v1277 = vadd.f32 %v360, %v1276
        %v1278 = vpop.f32.mrf.mxu0
        %v1279 = vpop.f32.mrf.mxu0
        %v1280 = vadd.f32 %v360, %v1279
        %v1281 = vpop.f32.mrf.mxu0
        %1282 = vmatprep.mubr.bf16.mxu0 %v785
        %1283 = vmatmul.mubr.bf16.gmra.mxu0 %v784
        %v1284 = vpop.f32.mrf.mxu0
        %v1285 = vadd.f32 %v360, %v1284
        %v1286 = vpop.f32.mrf.mxu0
        %v1287 = vpop.f32.mrf.mxu0
        %v1288 = vadd.f32 %v360, %v1287
        %v1289 = vpop.f32.mrf.mxu0
        %1290 = vmatprep.mubr.bf16.mxu0 %v787
        %1291 = vmatmul.mubr.bf16.gmra.mxu0 %v786
        %v1292 = vpop.f32.mrf.mxu0
        %v1293 = vadd.f32 %v360, %v1292
        %v1294 = vpop.f32.mrf.mxu0
        %v1295 = vpop.f32.mrf.mxu0
        %v1296 = vadd.f32 %v360, %v1295
        %v1297 = vpop.f32.mrf.mxu0
        %1298 = vmatprep.mubr.bf16.mxu0 %v789
        %1299 = vmatmul.mubr.bf16.gmra.mxu0 %v788
        %v1300 = vpop.f32.mrf.mxu0
        %v1301 = vadd.f32 %v360, %v1300
        %v1302 = vpop.f32.mrf.mxu0
        %v1303 = vpop.f32.mrf.mxu0
        %v1304 = vadd.f32 %v360, %v1303
        %v1305 = vpop.f32.mrf.mxu0
        %1306 = vmatprep.mubr.bf16.mxu0 %v791
        %1307 = vmatmul.mubr.bf16.gmra.mxu0 %v790
        %v1308 = vpop.f32.mrf.mxu0
        %v1309 = vadd.f32 %v360, %v1308
        %v1310 = vpop.f32.mrf.mxu0
        %v1311 = vpop.f32.mrf.mxu0
        %v1312 = vadd.f32 %v360, %v1311
        %v1313 = vpop.f32.mrf.mxu0
        %1314 = vmatprep.mubr.bf16.mxu0 %v793
        %1315 = vmatmul.mubr.bf16.gmra.mxu0 %v792
        %v1316 = vpop.f32.mrf.mxu0
        %v1317 = vadd.f32 %v360, %v1316
        %v1318 = vpop.f32.mrf.mxu0
        %v1319 = vpop.f32.mrf.mxu0
        %v1320 = vadd.f32 %v360, %v1319
        %v1321 = vpop.f32.mrf.mxu0
        %1322 = vmatprep.mubr.bf16.mxu0 %v795
        %1323 = vmatmul.mubr.bf16.gmra.mxu0 %v794
        %v1324 = vpop.f32.mrf.mxu0
        %v1325 = vadd.f32 %v360, %v1324
        %v1326 = vpop.f32.mrf.mxu0
        %v1327 = vpop.f32.mrf.mxu0
        %v1328 = vadd.f32 %v360, %v1327
        %v1329 = vpop.f32.mrf.mxu0
        %1330 = vmatprep.mubr.bf16.mxu0 %v797
        %1331 = vmatmul.mubr.bf16.gmra.mxu0 %v796
        %v1332 = vpop.f32.mrf.mxu0
        %v1333 = vadd.f32 %v360, %v1332
        %v1334 = vpop.f32.mrf.mxu0
        %v1335 = vpop.f32.mrf.mxu0
        %v1336 = vadd.f32 %v360, %v1335
        %v1337 = vpop.f32.mrf.mxu0
        %1338 = vmatprep.mubr.bf16.mxu0 %v799
        %1339 = vmatmul.mubr.bf16.gmra.mxu0 %v798
        %v1340 = vpop.f32.mrf.mxu0
        %v1341 = vadd.f32 %v360, %v1340
        %v1342 = vpop.f32.mrf.mxu0
        %v1343 = vpop.f32.mrf.mxu0
        %v1344 = vadd.f32 %v360, %v1343
        %v1345 = vpop.f32.mrf.mxu0
        %1346 = vmatprep.mubr.bf16.mxu0 %v801
        %1347 = vmatmul.mubr.bf16.gmra.mxu0 %v800
        %v1348 = vpop.f32.mrf.mxu0
        %v1349 = vadd.f32 %v360, %v1348
        %v1350 = vpop.f32.mrf.mxu0
        %v1351 = vpop.f32.mrf.mxu0
        %v1352 = vadd.f32 %v360, %v1351
        %v1353 = vpop.f32.mrf.mxu0
        %1354 = vmatprep.mubr.bf16.mxu0 %v803
        %1355 = vmatmul.mubr.bf16.gmra.mxu0 %v802
        %v1356 = vpop.f32.mrf.mxu0
        %v1357 = vadd.f32 %v360, %v1356
        %v1358 = vpop.f32.mrf.mxu0
        %v1359 = vpop.f32.mrf.mxu0
        %v1360 = vadd.f32 %v360, %v1359
        %v1361 = vpop.f32.mrf.mxu0
        %1362 = vmatprep.mubr.bf16.mxu0 %v805
        %1363 = vmatmul.mubr.bf16.gmra.mxu0 %v804
        %v1364 = vpop.f32.mrf.mxu0
        %v1365 = vadd.f32 %v360, %v1364
        %v1366 = vpop.f32.mrf.mxu0
        %v1367 = vpop.f32.mrf.mxu0
        %v1368 = vadd.f32 %v360, %v1367
        %v1369 = vpop.f32.mrf.mxu0
        %1370 = vmatprep.mubr.bf16.mxu0 %v807
        %1371 = vmatmul.mubr.bf16.gmra.mxu0 %v806
        %v1372 = vpop.f32.mrf.mxu0
        %v1373 = vadd.f32 %v360, %v1372
        %v1374 = vpop.f32.mrf.mxu0
        %v1375 = vpop.f32.mrf.mxu0
        %v1376 = vadd.f32 %v360, %v1375
        %v1377 = vpop.f32.mrf.mxu0
        %1378 = vmatprep.mubr.bf16.mxu0 %v809
        %1379 = vmatmul.mubr.bf16.gmra.mxu0 %v808
        %v1380 = vpop.f32.mrf.mxu0
        %v1381 = vadd.f32 %v360, %v1380
        %v1382 = vpop.f32.mrf.mxu0
        %v1383 = vpop.f32.mrf.mxu0
        %v1384 = vadd.f32 %v360, %v1383
        %v1385 = vpop.f32.mrf.mxu0
        %1386 = vmatprep.mubr.bf16.mxu0 %v811
        %1387 = vmatmul.mubr.bf16.gmra.mxu0 %v810
        %v1388 = vpop.f32.mrf.mxu0
        %v1389 = vadd.f32 %v360, %v1388
        %v1390 = vpop.f32.mrf.mxu0
        %v1391 = vpop.f32.mrf.mxu0
        %v1392 = vadd.f32 %v360, %v1391
        %v1393 = vpop.f32.mrf.mxu0
        %1394 = vmatprep.mubr.bf16.mxu0 %v813
        %1395 = vmatmul.mubr.bf16.gmra.mxu0 %v812
        %v1396 = vpop.f32.mrf.mxu0
        %v1397 = vadd.f32 %v360, %v1396
        %v1398 = vpop.f32.mrf.mxu0
        %v1399 = vpop.f32.mrf.mxu0
        %v1400 = vadd.f32 %v360, %v1399
        %v1401 = vpop.f32.mrf.mxu0
        %1402 = vmatprep.mubr.bf16.mxu0 %v815
        %1403 = vmatmul.mubr.bf16.gmra.mxu0 %v814
        %v1404 = vpop.f32.mrf.mxu0
        %v1405 = vadd.f32 %v360, %v1404
        %v1406 = vpop.f32.mrf.mxu0
        %v1407 = vpop.f32.mrf.mxu0
        %v1408 = vadd.f32 %v360, %v1407
        %v1409 = vpop.f32.mrf.mxu0
        %1410 = vmatprep.mubr.bf16.mxu0 %v817
        %1411 = vmatmul.mubr.bf16.gmra.mxu0 %v816
        %v1412 = vpop.f32.mrf.mxu0
        %v1413 = vadd.f32 %v360, %v1412
        %v1414 = vpop.f32.mrf.mxu0
        %v1415 = vpop.f32.mrf.mxu0
        %v1416 = vadd.f32 %v360, %v1415
        %v1417 = vpop.f32.mrf.mxu0
        %1418 = vmatprep.mubr.bf16.mxu0 %v819
        %1419 = vmatmul.mubr.bf16.gmra.mxu0 %v818
        %v1420 = vpop.f32.mrf.mxu0
        %v1421 = vadd.f32 %v360, %v1420
        %v1422 = vpop.f32.mrf.mxu0
        %v1423 = vpop.f32.mrf.mxu0
        %v1424 = vadd.f32 %v360, %v1423
        %v1425 = vpop.f32.mrf.mxu0
        %1426 = vmatprep.mubr.bf16.mxu0 %v821
        %1427 = vmatmul.mubr.bf16.gmra.mxu0 %v820
        %v1428 = vpop.f32.mrf.mxu0
        %v1429 = vadd.f32 %v360, %v1428
        %v1430 = vpop.f32.mrf.mxu0
        %v1431 = vpop.f32.mrf.mxu0
        %v1432 = vadd.f32 %v360, %v1431
        %v1433 = vpop.f32.mrf.mxu0
        %1434 = vmatprep.mubr.bf16.mxu0 %v823
        %1435 = vmatmul.mubr.bf16.gmra.mxu0 %v822
        %v1436 = vpop.f32.mrf.mxu0
        %v1437 = vadd.f32 %v360, %v1436
        %v1438 = vpop.f32.mrf.mxu0
        %v1439 = vpop.f32.mrf.mxu0
        %v1440 = vadd.f32 %v360, %v1439
        %v1441 = vpop.f32.mrf.mxu0
        %1442 = vmatprep.mubr.bf16.mxu0 %v825
        %1443 = vmatmul.mubr.bf16.gmra.mxu0 %v824
        %v1444 = vpop.f32.mrf.mxu0
        %v1445 = vadd.f32 %v360, %v1444
        %v1446 = vpop.f32.mrf.mxu0
        %v1447 = vpop.f32.mrf.mxu0
        %v1448 = vadd.f32 %v360, %v1447
        %v1449 = vpop.f32.mrf.mxu0
        %1450 = vmatprep.mubr.bf16.mxu0 %v827
        %1451 = vmatmul.mubr.bf16.gmra.mxu0 %v826
        %v1452 = vpop.f32.mrf.mxu0
        %v1453 = vadd.f32 %v360, %v1452
        %v1454 = vpop.f32.mrf.mxu0
        %v1455 = vpop.f32.mrf.mxu0
        %v1456 = vadd.f32 %v360, %v1455
        %v1457 = vpop.f32.mrf.mxu0
        %1458 = vmatprep.mubr.bf16.mxu0 %v829
        %1459 = vmatmul.mubr.bf16.gmra.mxu0 %v828
        %v1460 = vpop.f32.mrf.mxu0
        %v1461 = vadd.f32 %v360, %v1460
        %v1462 = vpop.f32.mrf.mxu0
        %v1463 = vpop.f32.mrf.mxu0
        %v1464 = vadd.f32 %v360, %v1463
        %v1465 = vpop.f32.mrf.mxu0
        %1466 = vmatprep.mubr.bf16.mxu0 %v831
        %1467 = vmatmul.mubr.bf16.gmra.mxu0 %v830
        %v1468 = vpop.f32.mrf.mxu0
        %v1469 = vadd.f32 %v360, %v1468
        %v1470 = vpop.f32.mrf.mxu0
        %v1471 = vpop.f32.mrf.mxu0
        %v1472 = vadd.f32 %v360, %v1471
        %v1473 = vpop.f32.mrf.mxu0
        %1474 = vmatprep.mubr.bf16.mxu0 %v833
        %1475 = vmatmul.mubr.bf16.gmra.mxu0 %v832
        %v1476 = vpop.f32.mrf.mxu0
        %v1477 = vadd.f32 %v360, %v1476
        %v1478 = vpop.f32.mrf.mxu0
        %v1479 = vpop.f32.mrf.mxu0
        %v1480 = vadd.f32 %v360, %v1479
        %v1481 = vpop.f32.mrf.mxu0
        %1482 = vmatprep.mubr.bf16.mxu0 %v835
        %1483 = vmatmul.mubr.bf16.gmra.mxu0 %v834
        %v1484 = vpop.f32.mrf.mxu0
        %v1485 = vadd.f32 %v360, %v1484
        %v1486 = vpop.f32.mrf.mxu0
        %v1487 = vpop.f32.mrf.mxu0
        %v1488 = vadd.f32 %v360, %v1487
        %v1489 = vpop.f32.mrf.mxu0
        %1490 = vmatprep.mubr.bf16.mxu0 %v837
        %1491 = vmatmul.mubr.bf16.gmra.mxu0 %v836
        %v1492 = vpop.f32.mrf.mxu0
        %v1493 = vadd.f32 %v360, %v1492
        %v1494 = vpop.f32.mrf.mxu0
        %v1495 = vpop.f32.mrf.mxu0
        %v1496 = vadd.f32 %v360, %v1495
        %v1497 = vpop.f32.mrf.mxu0
        %1498 = vmatprep.mubr.bf16.mxu0 %v839
        %1499 = vmatmul.mubr.bf16.gmra.mxu0 %v838
        %v1500 = vpop.f32.mrf.mxu0
        %v1501 = vadd.f32 %v360, %v1500
        %v1502 = vpop.f32.mrf.mxu0
        %v1503 = vpop.f32.mrf.mxu0
        %v1504 = vadd.f32 %v360, %v1503
        %v1505 = vpop.f32.mrf.mxu0
        %1506 = vmatprep.mubr.bf16.mxu0 %v841
        %1507 = vmatmul.mubr.bf16.gmra.mxu0 %v840
        %v1508 = vpop.f32.mrf.mxu0
        %v1509 = vadd.f32 %v360, %v1508
        %v1510 = vpop.f32.mrf.mxu0
        %v1511 = vpop.f32.mrf.mxu0
        %v1512 = vadd.f32 %v360, %v1511
        %v1513 = vpop.f32.mrf.mxu0
        %1514 = vmatprep.mubr.bf16.mxu0 %v843
        %1515 = vmatmul.mubr.bf16.gmra.mxu0 %v842
        %v1516 = vpop.f32.mrf.mxu0
        %v1517 = vadd.f32 %v360, %v1516
        %v1518 = vpop.f32.mrf.mxu0
        %v1519 = vpop.f32.mrf.mxu0
        %v1520 = vadd.f32 %v360, %v1519
        %v1521 = vpop.f32.mrf.mxu0
        %1522 = vmatprep.mubr.bf16.mxu0 %v845
        %1523 = vmatmul.mubr.bf16.gmra.mxu0 %v844
        %v1524 = vpop.f32.mrf.mxu0
        %v1525 = vadd.f32 %v360, %v1524
        %v1526 = vpop.f32.mrf.mxu0
        %v1527 = vpop.f32.mrf.mxu0
        %v1528 = vadd.f32 %v360, %v1527
        %v1529 = vpop.f32.mrf.mxu0
        %1530 = vmatprep.mubr.bf16.mxu0 %v847
        %1531 = vmatmul.mubr.bf16.gmra.mxu0 %v846
        %v1532 = vpop.f32.mrf.mxu0
        %v1533 = vadd.f32 %v360, %v1532
        %v1534 = vpop.f32.mrf.mxu0
        %v1535 = vpop.f32.mrf.mxu0
        %v1536 = vadd.f32 %v360, %v1535
        %v1537 = vpop.f32.mrf.mxu0
        %1538 = vmatprep.mubr.bf16.mxu0 %v849
        %1539 = vmatmul.mubr.bf16.gmra.mxu0 %v848
        %v1540 = vpop.f32.mrf.mxu0
        %v1541 = vadd.f32 %v360, %v1540
        %v1542 = vpop.f32.mrf.mxu0
        %v1543 = vpop.f32.mrf.mxu0
        %v1544 = vadd.f32 %v360, %v1543
        %v1545 = vpop.f32.mrf.mxu0
        %1546 = vmatprep.mubr.bf16.mxu0 %v851
        %1547 = vmatmul.mubr.bf16.gmra.mxu0 %v850
        %v1548 = vpop.f32.mrf.mxu0
        %v1549 = vadd.f32 %v360, %v1548
        %v1550 = vpop.f32.mrf.mxu0
        %v1551 = vpop.f32.mrf.mxu0
        %v1552 = vadd.f32 %v360, %v1551
        %v1553 = vpop.f32.mrf.mxu0
        %1554 = vmatprep.mubr.bf16.mxu0 %v853
        %1555 = vmatmul.mubr.bf16.gmra.mxu0 %v852
        %v1556 = vpop.f32.mrf.mxu0
        %v1557 = vadd.f32 %v360, %v1556
        %v1558 = vpop.f32.mrf.mxu0
        %v1559 = vpop.f32.mrf.mxu0
        %v1560 = vadd.f32 %v360, %v1559
        %v1561 = vpop.f32.mrf.mxu0
        %1562 = vmatprep.mubr.bf16.mxu0 %v855
        %1563 = vmatmul.mubr.bf16.gmra.mxu0 %v854
        %v1564 = vpop.f32.mrf.mxu0
        %v1565 = vadd.f32 %v360, %v1564
        %v1566 = vpop.f32.mrf.mxu0
        %v1567 = vpop.f32.mrf.mxu0
        %v1568 = vadd.f32 %v360, %v1567
        %v1569 = vpop.f32.mrf.mxu0
        %1570 = vmatprep.mubr.bf16.mxu0 %v857
        %1571 = vmatmul.mubr.bf16.gmra.mxu0 %v856
        %v1572 = vpop.f32.mrf.mxu0
        %v1573 = vadd.f32 %v360, %v1572
        %v1574 = vpop.f32.mrf.mxu0
        %v1575 = vpop.f32.mrf.mxu0
        %v1576 = vadd.f32 %v360, %v1575
        %v1577 = vpop.f32.mrf.mxu0
        %1578 = vmatprep.mubr.bf16.mxu0 %v859
        %1579 = vmatmul.mubr.bf16.gmra.mxu0 %v858
        %v1580 = vpop.f32.mrf.mxu0
        %v1581 = vadd.f32 %v360, %v1580
        %v1582 = vpop.f32.mrf.mxu0
        %v1583 = vpop.f32.mrf.mxu0
        %v1584 = vadd.f32 %v360, %v1583
        %v1585 = vpop.f32.mrf.mxu0
        %1586 = vmatprep.mubr.bf16.mxu0 %v861
        %1587 = vmatmul.mubr.bf16.gmra.mxu0 %v860
        %v1588 = vpop.f32.mrf.mxu0
        %v1589 = vadd.f32 %v360, %v1588
        %v1590 = vpop.f32.mrf.mxu0
        %v1591 = vpop.f32.mrf.mxu0
        %v1592 = vadd.f32 %v360, %v1591
        %v1593 = vpop.f32.mrf.mxu0
        %1594 = vmatprep.mubr.bf16.mxu0 %v863
        %1595 = vmatmul.mubr.bf16.gmra.mxu0 %v862
        %v1596 = vpop.f32.mrf.mxu0
        %v1597 = vadd.f32 %v360, %v1596
        %v1598 = vpop.f32.mrf.mxu0
        %v1599 = vpop.f32.mrf.mxu0
        %v1600 = vadd.f32 %v360, %v1599
        %v1601 = vpop.f32.mrf.mxu0
        %1602 = vmatprep.mubr.bf16.mxu0 %v865
        %1603 = vmatmul.mubr.bf16.gmra.mxu0 %v864
        %v1604 = vpop.f32.mrf.mxu0
        %v1605 = vadd.f32 %v360, %v1604
        %v1606 = vpop.f32.mrf.mxu0
        %v1607 = vpop.f32.mrf.mxu0
        %v1608 = vadd.f32 %v360, %v1607
        %v1609 = vpop.f32.mrf.mxu0
        %1610 = vmatprep.mubr.bf16.mxu0 %v867
        %1611 = vmatmul.mubr.bf16.gmra.mxu0 %v866
        %v1612 = vpop.f32.mrf.mxu0
        %v1613 = vadd.f32 %v360, %v1612
        %v1614 = vpop.f32.mrf.mxu0
        %v1615 = vpop.f32.mrf.mxu0
        %v1616 = vadd.f32 %v360, %v1615
        %v1617 = vpop.f32.mrf.mxu0
        %1618 = vmatprep.mubr.bf16.mxu0 %v869
        %1619 = vmatmul.mubr.bf16.gmra.mxu0 %v868
        %v1620 = vpop.f32.mrf.mxu0
        %v1621 = vadd.f32 %v360, %v1620
        %v1622 = vpop.f32.mrf.mxu0
        %v1623 = vpop.f32.mrf.mxu0
        %v1624 = vadd.f32 %v360, %v1623
        %v1625 = vpop.f32.mrf.mxu0
        %1626 = vmatprep.mubr.bf16.mxu0 %v871
        %1627 = vmatmul.mubr.bf16.gmra.mxu0 %v870
        %v1628 = vpop.f32.mrf.mxu0
        %v1629 = vadd.f32 %v360, %v1628
        %v1630 = vpop.f32.mrf.mxu0
        %v1631 = vpop.f32.mrf.mxu0
        %v1632 = vadd.f32 %v360, %v1631
        %v1633 = vpop.f32.mrf.mxu0
        %1634 = vmatprep.mubr.bf16.mxu0 %v873
        %1635 = vmatmul.mubr.bf16.gmra.mxu0 %v872
        %v1636 = vpop.f32.mrf.mxu0
        %v1637 = vadd.f32 %v360, %v1636
        %v1638 = vpop.f32.mrf.mxu0
        %v1639 = vpop.f32.mrf.mxu0
        %v1640 = vadd.f32 %v360, %v1639
        %v1641 = vpop.f32.mrf.mxu0
        %1642 = vdwg.mxu0
        %v1643 = vmax.f32 %v1133, 0.0
        %v1644 = vmax.f32 %v1136, 0.0
        %v1645 = vmax.f32 %v1141, 0.0
        %v1646 = vmax.f32 %v1144, 0.0
        %v1647 = vmax.f32 %v1149, 0.0
        %v1648 = vmax.f32 %v1152, 0.0
        %v1649 = vmax.f32 %v1157, 0.0
        %v1650 = vmax.f32 %v1160, 0.0
        %v1651 = vmax.f32 %v1165, 0.0
        %v1652 = vmax.f32 %v1168, 0.0
        %v1653 = vmax.f32 %v1173, 0.0
        %v1654 = vmax.f32 %v1176, 0.0
        %v1655 = vmax.f32 %v1181, 0.0
        %v1656 = vmax.f32 %v1184, 0.0
        %v1657 = vmax.f32 %v1189, 0.0
        %v1658 = vmax.f32 %v1192, 0.0
        %v1659 = vmax.f32 %v1197, 0.0
        %v1660 = vmax.f32 %v1200, 0.0
        %v1661 = vmax.f32 %v1205, 0.0
        %v1662 = vmax.f32 %v1208, 0.0
        %v1663 = vmax.f32 %v1213, 0.0
        %v1664 = vmax.f32 %v1216, 0.0
        %v1665 = vmax.f32 %v1221, 0.0
        %v1666 = vmax.f32 %v1224, 0.0
        %v1667 = vmax.f32 %v1229, 0.0
        %v1668 = vmax.f32 %v1232, 0.0
        %v1669 = vmax.f32 %v1237, 0.0
        %v1670 = vmax.f32 %v1240, 0.0
        %v1671 = vmax.f32 %v1245, 0.0
        %v1672 = vmax.f32 %v1248, 0.0
        %v1673 = vmax.f32 %v1253, 0.0
        %v1674 = vmax.f32 %v1256, 0.0
        %v1675 = vmax.f32 %v1261, 0.0
        %v1676 = vmax.f32 %v1264, 0.0
        %v1677 = vmax.f32 %v1269, 0.0
        %v1678 = vmax.f32 %v1272, 0.0
        %v1679 = vmax.f32 %v1277, 0.0
        %v1680 = vmax.f32 %v1280, 0.0
        %v1681 = vmax.f32 %v1285, 0.0
        %v1682 = vmax.f32 %v1288, 0.0
        %v1683 = vmax.f32 %v1293, 0.0
        %v1684 = vmax.f32 %v1296, 0.0
        %v1685 = vmax.f32 %v1301, 0.0
        %v1686 = vmax.f32 %v1304, 0.0
        %v1687 = vmax.f32 %v1309, 0.0
        %v1688 = vmax.f32 %v1312, 0.0
        %v1689 = vmax.f32 %v1317, 0.0
        %v1690 = vmax.f32 %v1320, 0.0
        %v1691 = vmax.f32 %v1325, 0.0
        %v1692 = vmax.f32 %v1328, 0.0
        %v1693 = vmax.f32 %v1333, 0.0
        %v1694 = vmax.f32 %v1336, 0.0
        %v1695 = vmax.f32 %v1341, 0.0
        %v1696 = vmax.f32 %v1344, 0.0
        %v1697 = vmax.f32 %v1349, 0.0
        %v1698 = vmax.f32 %v1352, 0.0
        %v1699 = vmax.f32 %v1357, 0.0
        %v1700 = vmax.f32 %v1360, 0.0
        %v1701 = vmax.f32 %v1365, 0.0
        %v1702 = vmax.f32 %v1368, 0.0
        %v1703 = vmax.f32 %v1373, 0.0
        %v1704 = vmax.f32 %v1376, 0.0
        %v1705 = vmax.f32 %v1381, 0.0
        %v1706 = vmax.f32 %v1384, 0.0
        %v1707 = vmax.f32 %v1389, 0.0
        %v1708 = vmax.f32 %v1392, 0.0
        %v1709 = vmax.f32 %v1397, 0.0
        %v1710 = vmax.f32 %v1400, 0.0
        %v1711 = vmax.f32 %v1405, 0.0
        %v1712 = vmax.f32 %v1408, 0.0
        %v1713 = vmax.f32 %v1413, 0.0
        %v1714 = vmax.f32 %v1416, 0.0
        %v1715 = vmax.f32 %v1421, 0.0
        %v1716 = vmax.f32 %v1424, 0.0
        %v1717 = vmax.f32 %v1429, 0.0
        %v1718 = vmax.f32 %v1432, 0.0
        %v1719 = vmax.f32 %v1437, 0.0
        %v1720 = vmax.f32 %v1440, 0.0
        %v1721 = vmax.f32 %v1445, 0.0
        %v1722 = vmax.f32 %v1448, 0.0
        %v1723 = vmax.f32 %v1453, 0.0
        %v1724 = vmax.f32 %v1456, 0.0
        %v1725 = vmax.f32 %v1461, 0.0
        %v1726 = vmax.f32 %v1464, 0.0
        %v1727 = vmax.f32 %v1469, 0.0
        %v1728 = vmax.f32 %v1472, 0.0
        %v1729 = vmax.f32 %v1477, 0.0
        %v1730 = vmax.f32 %v1480, 0.0
        %v1731 = vmax.f32 %v1485, 0.0
        %v1732 = vmax.f32 %v1488, 0.0
        %v1733 = vmax.f32 %v1493, 0.0
        %v1734 = vmax.f32 %v1496, 0.0
        %v1735 = vmax.f32 %v1501, 0.0
        %v1736 = vmax.f32 %v1504, 0.0
        %v1737 = vmax.f32 %v1509, 0.0
        %v1738 = vmax.f32 %v1512, 0.0
        %v1739 = vmax.f32 %v1517, 0.0
        %v1740 = vmax.f32 %v1520, 0.0
        %v1741 = vmax.f32 %v1525, 0.0
        %v1742 = vmax.f32 %v1528, 0.0
        %v1743 = vmax.f32 %v1533, 0.0
        %v1744 = vmax.f32 %v1536, 0.0
        %v1745 = vmax.f32 %v1541, 0.0
        %v1746 = vmax.f32 %v1544, 0.0
        %v1747 = vmax.f32 %v1549, 0.0
        %v1748 = vmax.f32 %v1552, 0.0
        %v1749 = vmax.f32 %v1557, 0.0
        %v1750 = vmax.f32 %v1560, 0.0
        %v1751 = vmax.f32 %v1565, 0.0
        %v1752 = vmax.f32 %v1568, 0.0
        %v1753 = vmax.f32 %v1573, 0.0
        %v1754 = vmax.f32 %v1576, 0.0
        %v1755 = vmax.f32 %v1581, 0.0
        %v1756 = vmax.f32 %v1584, 0.0
        %v1757 = vmax.f32 %v1589, 0.0
        %v1758 = vmax.f32 %v1592, 0.0
        %v1759 = vmax.f32 %v1597, 0.0
        %v1760 = vmax.f32 %v1600, 0.0
        %v1761 = vmax.f32 %v1605, 0.0
        %v1762 = vmax.f32 %v1608, 0.0
        %v1763 = vmax.f32 %v1613, 0.0
        %v1764 = vmax.f32 %v1616, 0.0
        %v1765 = vmax.f32 %v1621, 0.0
        %v1766 = vmax.f32 %v1624, 0.0
        %v1767 = vmax.f32 %v1629, 0.0
        %v1768 = vmax.f32 %v1632, 0.0
        %v1769 = vmax.f32 %v1637, 0.0
        %v1770 = vmax.f32 %v1640, 0.0
        %v1771 = vpack.c.bf16 %v1644, %v1643
        %v1772 = vpack.c.bf16 %v1646, %v1645
        %v1773 = vpack.c.bf16 %v1648, %v1647
        %v1774 = vpack.c.bf16 %v1650, %v1649
        %v1775 = vpack.c.bf16 %v1652, %v1651
        %v1776 = vpack.c.bf16 %v1654, %v1653
        %v1777 = vpack.c.bf16 %v1656, %v1655
        %v1778 = vpack.c.bf16 %v1658, %v1657
        %v1779 = vpack.c.bf16 %v1660, %v1659
        %v1780 = vpack.c.bf16 %v1662, %v1661
        %v1781 = vpack.c.bf16 %v1664, %v1663
        %v1782 = vpack.c.bf16 %v1666, %v1665
        %v1783 = vpack.c.bf16 %v1668, %v1667
        %v1784 = vpack.c.bf16 %v1670, %v1669
        %v1785 = vpack.c.bf16 %v1672, %v1671
        %v1786 = vpack.c.bf16 %v1674, %v1673
        %v1787 = vpack.c.bf16 %v1676, %v1675
        %v1788 = vpack.c.bf16 %v1678, %v1677
        %v1789 = vpack.c.bf16 %v1680, %v1679
        %v1790 = vpack.c.bf16 %v1682, %v1681
        %v1791 = vpack.c.bf16 %v1684, %v1683
        %v1792 = vpack.c.bf16 %v1686, %v1685
        %v1793 = vpack.c.bf16 %v1688, %v1687
        %v1794 = vpack.c.bf16 %v1690, %v1689
        %v1795 = vpack.c.bf16 %v1692, %v1691
        %v1796 = vpack.c.bf16 %v1694, %v1693
        %v1797 = vpack.c.bf16 %v1696, %v1695
        %v1798 = vpack.c.bf16 %v1698, %v1697
        %v1799 = vpack.c.bf16 %v1700, %v1699
        %v1800 = vpack.c.bf16 %v1702, %v1701
        %v1801 = vpack.c.bf16 %v1704, %v1703
        %v1802 = vpack.c.bf16 %v1706, %v1705
        %v1803 = vpack.c.bf16 %v1708, %v1707
        %v1804 = vpack.c.bf16 %v1710, %v1709
        %v1805 = vpack.c.bf16 %v1712, %v1711
        %v1806 = vpack.c.bf16 %v1714, %v1713
        %v1807 = vpack.c.bf16 %v1716, %v1715
        %v1808 = vpack.c.bf16 %v1718, %v1717
        %v1809 = vpack.c.bf16 %v1720, %v1719
        %v1810 = vpack.c.bf16 %v1722, %v1721
        %v1811 = vpack.c.bf16 %v1724, %v1723
        %v1812 = vpack.c.bf16 %v1726, %v1725
        %v1813 = vpack.c.bf16 %v1728, %v1727
        %v1814 = vpack.c.bf16 %v1730, %v1729
        %v1815 = vpack.c.bf16 %v1732, %v1731
        %v1816 = vpack.c.bf16 %v1734, %v1733
        %v1817 = vpack.c.bf16 %v1736, %v1735
        %v1818 = vpack.c.bf16 %v1738, %v1737
        %v1819 = vpack.c.bf16 %v1740, %v1739
        %v1820 = vpack.c.bf16 %v1742, %v1741
        %v1821 = vpack.c.bf16 %v1744, %v1743
        %v1822 = vpack.c.bf16 %v1746, %v1745
        %v1823 = vpack.c.bf16 %v1748, %v1747
        %v1824 = vpack.c.bf16 %v1750, %v1749
        %v1825 = vpack.c.bf16 %v1752, %v1751
        %v1826 = vpack.c.bf16 %v1754, %v1753
        %v1827 = vpack.c.bf16 %v1756, %v1755
        %v1828 = vpack.c.bf16 %v1758, %v1757
        %v1829 = vpack.c.bf16 %v1760, %v1759
        %v1830 = vpack.c.bf16 %v1762, %v1761
        %v1831 = vpack.c.bf16 %v1764, %v1763
        %v1832 = vpack.c.bf16 %v1766, %v1765
        %v1833 = vpack.c.bf16 %v1768, %v1767
        %v1834 = vpack.c.bf16 %v1770, %v1769
        %v1899 = vunpack.c.l.b16 %v1771
        %v1900 = vunpack.c.h.b16 %v1771
        %v1901 = vunpack.c.l.b16 %v1772
        %v1902 = vunpack.c.h.b16 %v1772
        %v1903 = vunpack.c.l.b16 %v1773
        %v1904 = vunpack.c.h.b16 %v1773
        %v1905 = vunpack.c.l.b16 %v1774
        %v1906 = vunpack.c.h.b16 %v1774
        %v1907 = vunpack.c.l.b16 %v1775
        %v1908 = vunpack.c.h.b16 %v1775
        %v1909 = vunpack.c.l.b16 %v1776
        %v1910 = vunpack.c.h.b16 %v1776
        %v1911 = vunpack.c.l.b16 %v1777
        %v1912 = vunpack.c.h.b16 %v1777
        %v1913 = vunpack.c.l.b16 %v1778
        %v1914 = vunpack.c.h.b16 %v1778
        %v1915 = vunpack.c.l.b16 %v1779
        %v1916 = vunpack.c.h.b16 %v1779
        %v1917 = vunpack.c.l.b16 %v1780
        %v1918 = vunpack.c.h.b16 %v1780
        %v1919 = vunpack.c.l.b16 %v1781
        %v1920 = vunpack.c.h.b16 %v1781
        %v1921 = vunpack.c.l.b16 %v1782
        %v1922 = vunpack.c.h.b16 %v1782
        %v1923 = vunpack.c.l.b16 %v1783
        %v1924 = vunpack.c.h.b16 %v1783
        %v1925 = vunpack.c.l.b16 %v1784
        %v1926 = vunpack.c.h.b16 %v1784
        %v1927 = vunpack.c.l.b16 %v1785
        %v1928 = vunpack.c.h.b16 %v1785
        %v1929 = vunpack.c.l.b16 %v1786
        %v1930 = vunpack.c.h.b16 %v1786
        %v1931 = vunpack.c.l.b16 %v1787
        %v1932 = vunpack.c.h.b16 %v1787
        %v1933 = vunpack.c.l.b16 %v1788
        %v1934 = vunpack.c.h.b16 %v1788
        %v1935 = vunpack.c.l.b16 %v1789
        %v1936 = vunpack.c.h.b16 %v1789
        %v1937 = vunpack.c.l.b16 %v1790
        %v1938 = vunpack.c.h.b16 %v1790
        %v1939 = vunpack.c.l.b16 %v1791
        %v1940 = vunpack.c.h.b16 %v1791
        %v1941 = vunpack.c.l.b16 %v1792
        %v1942 = vunpack.c.h.b16 %v1792
        %v1943 = vunpack.c.l.b16 %v1793
        %v1944 = vunpack.c.h.b16 %v1793
        %v1945 = vunpack.c.l.b16 %v1794
        %v1946 = vunpack.c.h.b16 %v1794
        %v1947 = vunpack.c.l.b16 %v1795
        %v1948 = vunpack.c.h.b16 %v1795
        %v1949 = vunpack.c.l.b16 %v1796
        %v1950 = vunpack.c.h.b16 %v1796
        %v1951 = vunpack.c.l.b16 %v1797
        %v1952 = vunpack.c.h.b16 %v1797
        %v1953 = vunpack.c.l.b16 %v1798
        %v1954 = vunpack.c.h.b16 %v1798
        %v1955 = vunpack.c.l.b16 %v1799
        %v1956 = vunpack.c.h.b16 %v1799
        %v1957 = vunpack.c.l.b16 %v1800
        %v1958 = vunpack.c.h.b16 %v1800
        %v1959 = vunpack.c.l.b16 %v1801
        %v1960 = vunpack.c.h.b16 %v1801
        %v1961 = vunpack.c.l.b16 %v1802
        %v1962 = vunpack.c.h.b16 %v1802
        %v1963 = vunpack.c.l.b16 %v1803
        %v1964 = vunpack.c.h.b16 %v1803
        %v1965 = vunpack.c.l.b16 %v1804
        %v1966 = vunpack.c.h.b16 %v1804
        %v1967 = vunpack.c.l.b16 %v1805
        %v1968 = vunpack.c.h.b16 %v1805
        %v1969 = vunpack.c.l.b16 %v1806
        %v1970 = vunpack.c.h.b16 %v1806
        %v1971 = vunpack.c.l.b16 %v1807
        %v1972 = vunpack.c.h.b16 %v1807
        %v1973 = vunpack.c.l.b16 %v1808
        %v1974 = vunpack.c.h.b16 %v1808
        %v1975 = vunpack.c.l.b16 %v1809
        %v1976 = vunpack.c.h.b16 %v1809
        %v1977 = vunpack.c.l.b16 %v1810
        %v1978 = vunpack.c.h.b16 %v1810
        %v1979 = vunpack.c.l.b16 %v1811
        %v1980 = vunpack.c.h.b16 %v1811
        %v1981 = vunpack.c.l.b16 %v1812
        %v1982 = vunpack.c.h.b16 %v1812
        %v1983 = vunpack.c.l.b16 %v1813
        %v1984 = vunpack.c.h.b16 %v1813
        %v1985 = vunpack.c.l.b16 %v1814
        %v1986 = vunpack.c.h.b16 %v1814
        %v1987 = vunpack.c.l.b16 %v1815
        %v1988 = vunpack.c.h.b16 %v1815
        %v1989 = vunpack.c.l.b16 %v1816
        %v1990 = vunpack.c.h.b16 %v1816
        %v1991 = vunpack.c.l.b16 %v1817
        %v1992 = vunpack.c.h.b16 %v1817
        %v1993 = vunpack.c.l.b16 %v1818
        %v1994 = vunpack.c.h.b16 %v1818
        %v1995 = vunpack.c.l.b16 %v1819
        %v1996 = vunpack.c.h.b16 %v1819
        %v1997 = vunpack.c.l.b16 %v1820
        %v1998 = vunpack.c.h.b16 %v1820
        %v1999 = vunpack.c.l.b16 %v1821
        %v2000 = vunpack.c.h.b16 %v1821
        %v2001 = vunpack.c.l.b16 %v1822
        %v2002 = vunpack.c.h.b16 %v1822
        %v2003 = vunpack.c.l.b16 %v1823
        %v2004 = vunpack.c.h.b16 %v1823
        %v2005 = vunpack.c.l.b16 %v1824
        %v2006 = vunpack.c.h.b16 %v1824
        %v2007 = vunpack.c.l.b16 %v1825
        %v2008 = vunpack.c.h.b16 %v1825
        %v2009 = vunpack.c.l.b16 %v1826
        %v2010 = vunpack.c.h.b16 %v1826
        %v2011 = vunpack.c.l.b16 %v1827
        %v2012 = vunpack.c.h.b16 %v1827
        %v2013 = vunpack.c.l.b16 %v1828
        %v2014 = vunpack.c.h.b16 %v1828
        %v2015 = vunpack.c.l.b16 %v1829
        %v2016 = vunpack.c.h.b16 %v1829
        %v2017 = vunpack.c.l.b16 %v1830
        %v2018 = vunpack.c.h.b16 %v1830
        %v2019 = vunpack.c.l.b16 %v1831
        %v2020 = vunpack.c.h.b16 %v1831
        %v2021 = vunpack.c.l.b16 %v1832
        %v2022 = vunpack.c.h.b16 %v1832
        %v2023 = vunpack.c.l.b16 %v1833
        %v2024 = vunpack.c.h.b16 %v1833
        %v2025 = vunpack.c.l.b16 %v1834
        %v2026 = vunpack.c.h.b16 %v1834
        %v2027 = vpack.c.b16 %v1899, %v1899
        %v2028 = vpack.c.b16 %v1900, %v1900
        %v2029 = vpack.c.b16 %v1901, %v1901
        %v2030 = vpack.c.b16 %v1902, %v1902
        %v2031 = vpack.c.b16 %v1903, %v1903
        %v2032 = vpack.c.b16 %v1904, %v1904
        %v2033 = vpack.c.b16 %v1905, %v1905
        %v2034 = vpack.c.b16 %v1906, %v1906
        %v2035 = vpack.c.b16 %v1907, %v1907
        %v2036 = vpack.c.b16 %v1908, %v1908
        %v2037 = vpack.c.b16 %v1909, %v1909
        %v2038 = vpack.c.b16 %v1910, %v1910
        %v2039 = vpack.c.b16 %v1911, %v1911
        %v2040 = vpack.c.b16 %v1912, %v1912
        %v2041 = vpack.c.b16 %v1913, %v1913
        %v2042 = vpack.c.b16 %v1914, %v1914
        %v2043 = vpack.c.b16 %v1915, %v1915
        %v2044 = vpack.c.b16 %v1916, %v1916
        %v2045 = vpack.c.b16 %v1917, %v1917
        %v2046 = vpack.c.b16 %v1918, %v1918
        %v2047 = vpack.c.b16 %v1919, %v1919
        %v2048 = vpack.c.b16 %v1920, %v1920
        %v2049 = vpack.c.b16 %v1921, %v1921
        %v2050 = vpack.c.b16 %v1922, %v1922
        %v2051 = vpack.c.b16 %v1923, %v1923
        %v2052 = vpack.c.b16 %v1924, %v1924
        %v2053 = vpack.c.b16 %v1925, %v1925
        %v2054 = vpack.c.b16 %v1926, %v1926
        %v2055 = vpack.c.b16 %v1927, %v1927
        %v2056 = vpack.c.b16 %v1928, %v1928
        %v2057 = vpack.c.b16 %v1929, %v1929
        %v2058 = vpack.c.b16 %v1930, %v1930
        %v2059 = vpack.c.b16 %v1931, %v1931
        %v2060 = vpack.c.b16 %v1932, %v1932
        %v2061 = vpack.c.b16 %v1933, %v1933
        %v2062 = vpack.c.b16 %v1934, %v1934
        %v2063 = vpack.c.b16 %v1935, %v1935
        %v2064 = vpack.c.b16 %v1936, %v1936
        %v2065 = vpack.c.b16 %v1937, %v1937
        %v2066 = vpack.c.b16 %v1938, %v1938
        %v2067 = vpack.c.b16 %v1939, %v1939
        %v2068 = vpack.c.b16 %v1940, %v1940
        %v2069 = vpack.c.b16 %v1941, %v1941
        %v2070 = vpack.c.b16 %v1942, %v1942
        %v2071 = vpack.c.b16 %v1943, %v1943
        %v2072 = vpack.c.b16 %v1944, %v1944
        %v2073 = vpack.c.b16 %v1945, %v1945
        %v2074 = vpack.c.b16 %v1946, %v1946
        %v2075 = vpack.c.b16 %v1947, %v1947
        %v2076 = vpack.c.b16 %v1948, %v1948
        %v2077 = vpack.c.b16 %v1949, %v1949
        %v2078 = vpack.c.b16 %v1950, %v1950
        %v2079 = vpack.c.b16 %v1951, %v1951
        %v2080 = vpack.c.b16 %v1952, %v1952
        %v2081 = vpack.c.b16 %v1953, %v1953
        %v2082 = vpack.c.b16 %v1954, %v1954
        %v2083 = vpack.c.b16 %v1955, %v1955
        %v2084 = vpack.c.b16 %v1956, %v1956
        %v2085 = vpack.c.b16 %v1957, %v1957
        %v2086 = vpack.c.b16 %v1958, %v1958
        %v2087 = vpack.c.b16 %v1959, %v1959
        %v2088 = vpack.c.b16 %v1960, %v1960
        %v2089 = vpack.c.b16 %v1961, %v1961
        %v2090 = vpack.c.b16 %v1962, %v1962
        %v2091 = vpack.c.b16 %v1963, %v1963
        %v2092 = vpack.c.b16 %v1964, %v1964
        %v2093 = vpack.c.b16 %v1965, %v1965
        %v2094 = vpack.c.b16 %v1966, %v1966
        %v2095 = vpack.c.b16 %v1967, %v1967
        %v2096 = vpack.c.b16 %v1968, %v1968
        %v2097 = vpack.c.b16 %v1969, %v1969
        %v2098 = vpack.c.b16 %v1970, %v1970
        %v2099 = vpack.c.b16 %v1971, %v1971
        %v2100 = vpack.c.b16 %v1972, %v1972
        %v2101 = vpack.c.b16 %v1973, %v1973
        %v2102 = vpack.c.b16 %v1974, %v1974
        %v2103 = vpack.c.b16 %v1975, %v1975
        %v2104 = vpack.c.b16 %v1976, %v1976
        %v2105 = vpack.c.b16 %v1977, %v1977
        %v2106 = vpack.c.b16 %v1978, %v1978
        %v2107 = vpack.c.b16 %v1979, %v1979
        %v2108 = vpack.c.b16 %v1980, %v1980
        %v2109 = vpack.c.b16 %v1981, %v1981
        %v2110 = vpack.c.b16 %v1982, %v1982
        %v2111 = vpack.c.b16 %v1983, %v1983
        %v2112 = vpack.c.b16 %v1984, %v1984
        %v2113 = vpack.c.b16 %v1985, %v1985
        %v2114 = vpack.c.b16 %v1986, %v1986
        %v2115 = vpack.c.b16 %v1987, %v1987
        %v2116 = vpack.c.b16 %v1988, %v1988
        %v2117 = vpack.c.b16 %v1989, %v1989
        %v2118 = vpack.c.b16 %v1990, %v1990
        %v2119 = vpack.c.b16 %v1991, %v1991
        %v2120 = vpack.c.b16 %v1992, %v1992
        %v2121 = vpack.c.b16 %v1993, %v1993
        %v2122 = vpack.c.b16 %v1994, %v1994
        %v2123 = vpack.c.b16 %v1995, %v1995
        %v2124 = vpack.c.b16 %v1996, %v1996
        %v2125 = vpack.c.b16 %v1997, %v1997
        %v2126 = vpack.c.b16 %v1998, %v1998
        %v2127 = vpack.c.b16 %v1999, %v1999
        %v2128 = vpack.c.b16 %v2000, %v2000
        %v2129 = vpack.c.b16 %v2001, %v2001
        %v2130 = vpack.c.b16 %v2002, %v2002
        %v2131 = vpack.c.b16 %v2003, %v2003
        %v2132 = vpack.c.b16 %v2004, %v2004
        %v2133 = vpack.c.b16 %v2005, %v2005
        %v2134 = vpack.c.b16 %v2006, %v2006
        %v2135 = vpack.c.b16 %v2007, %v2007
        %v2136 = vpack.c.b16 %v2008, %v2008
        %v2137 = vpack.c.b16 %v2009, %v2009
        %v2138 = vpack.c.b16 %v2010, %v2010
        %v2139 = vpack.c.b16 %v2011, %v2011
        %v2140 = vpack.c.b16 %v2012, %v2012
        %v2141 = vpack.c.b16 %v2013, %v2013
        %v2142 = vpack.c.b16 %v2014, %v2014
        %v2143 = vpack.c.b16 %v2015, %v2015
        %v2144 = vpack.c.b16 %v2016, %v2016
        %v2145 = vpack.c.b16 %v2017, %v2017
        %v2146 = vpack.c.b16 %v2018, %v2018
        %v2147 = vpack.c.b16 %v2019, %v2019
        %v2148 = vpack.c.b16 %v2020, %v2020
        %v2149 = vpack.c.b16 %v2021, %v2021
        %v2150 = vpack.c.b16 %v2022, %v2022
        %v2151 = vpack.c.b16 %v2023, %v2023
        %v2152 = vpack.c.b16 %v2024, %v2024
        %v2153 = vpack.c.b16 %v2025, %v2025
        %v2154 = vpack.c.b16 %v2026, %v2026
        %vm2283 = vcmask 125952
        %2284 = vst.msk [vmem:[%s192] sm:$0xf] %vm2283, %v2027
        %2285 = vst.msk [vmem:[%s192 + $0x4] sm:$0xf] %vm2283, %v2028
        %2286 = vst.msk [vmem:[%s192 + $0x8] sm:$0xf] %vm2283, %v2029
        %2287 = vst.msk [vmem:[%s192 + $0xc] sm:$0xf] %vm2283, %v2030
        %2288 = vst.msk [vmem:[%s192 + $0x10] sm:$0xf] %vm2283, %v2031
        %2289 = vst.msk [vmem:[%s192 + $0x14] sm:$0xf] %vm2283, %v2032
        %2290 = vst.msk [vmem:[%s192 + $0x18] sm:$0xf] %vm2283, %v2033
        %2291 = vst.msk [vmem:[%s192 + $0x1c] sm:$0xf] %vm2283, %v2034
        %2292 = vst.msk [vmem:[%s192 + $0x20] sm:$0xf] %vm2283, %v2035
        %2293 = vst.msk [vmem:[%s192 + $0x24] sm:$0xf] %vm2283, %v2036
        %2294 = vst.msk [vmem:[%s192 + $0x28] sm:$0xf] %vm2283, %v2037
        %2295 = vst.msk [vmem:[%s192 + $0x2c] sm:$0xf] %vm2283, %v2038
        %2296 = vst.msk [vmem:[%s192 + $0x30] sm:$0xf] %vm2283, %v2039
        %2297 = vst.msk [vmem:[%s192 + $0x34] sm:$0xf] %vm2283, %v2040
        %2298 = vst.msk [vmem:[%s192 + $0x38] sm:$0xf] %vm2283, %v2041
        %2299 = vst.msk [vmem:[%s192 + $0x3c] sm:$0xf] %vm2283, %v2042
        %2300 = vst.msk [vmem:[%s192 + $0x40] sm:$0xf] %vm2283, %v2043
        %2301 = vst.msk [vmem:[%s192 + $0x44] sm:$0xf] %vm2283, %v2044
        %2302 = vst.msk [vmem:[%s192 + $0x48] sm:$0xf] %vm2283, %v2045
        %2303 = vst.msk [vmem:[%s192 + $0x4c] sm:$0xf] %vm2283, %v2046
        %2304 = vst.msk [vmem:[%s192 + $0x50] sm:$0xf] %vm2283, %v2047
        %2305 = vst.msk [vmem:[%s192 + $0x54] sm:$0xf] %vm2283, %v2048
        %2306 = vst.msk [vmem:[%s192 + $0x58] sm:$0xf] %vm2283, %v2049
        %2307 = vst.msk [vmem:[%s192 + $0x5c] sm:$0xf] %vm2283, %v2050
        %2308 = vst.msk [vmem:[%s192 + $0x60] sm:$0xf] %vm2283, %v2051
        %2309 = vst.msk [vmem:[%s192 + $0x64] sm:$0xf] %vm2283, %v2052
        %2310 = vst.msk [vmem:[%s192 + $0x68] sm:$0xf] %vm2283, %v2053
        %2311 = vst.msk [vmem:[%s192 + $0x6c] sm:$0xf] %vm2283, %v2054
        %2312 = vst.msk [vmem:[%s192 + $0x70] sm:$0xf] %vm2283, %v2055
        %2313 = vst.msk [vmem:[%s192 + $0x74] sm:$0xf] %vm2283, %v2056
        %2314 = vst.msk [vmem:[%s192 + $0x78] sm:$0xf] %vm2283, %v2057
        %2315 = vst.msk [vmem:[%s192 + $0x7c] sm:$0xf] %vm2283, %v2058
        %2316 = vst.msk [vmem:[%s192 + $0x80] sm:$0xf] %vm2283, %v2059
        %2317 = vst.msk [vmem:[%s192 + $0x84] sm:$0xf] %vm2283, %v2060
        %2318 = vst.msk [vmem:[%s192 + $0x88] sm:$0xf] %vm2283, %v2061
        %2319 = vst.msk [vmem:[%s192 + $0x8c] sm:$0xf] %vm2283, %v2062
        %2320 = vst.msk [vmem:[%s192 + $0x90] sm:$0xf] %vm2283, %v2063
        %2321 = vst.msk [vmem:[%s192 + $0x94] sm:$0xf] %vm2283, %v2064
        %2322 = vst.msk [vmem:[%s192 + $0x98] sm:$0xf] %vm2283, %v2065
        %2323 = vst.msk [vmem:[%s192 + $0x9c] sm:$0xf] %vm2283, %v2066
        %2324 = vst.msk [vmem:[%s192 + $0xa0] sm:$0xf] %vm2283, %v2067
        %2325 = vst.msk [vmem:[%s192 + $0xa4] sm:$0xf] %vm2283, %v2068
        %2326 = vst.msk [vmem:[%s192 + $0xa8] sm:$0xf] %vm2283, %v2069
        %2327 = vst.msk [vmem:[%s192 + $0xac] sm:$0xf] %vm2283, %v2070
        %2328 = vst.msk [vmem:[%s192 + $0xb0] sm:$0xf] %vm2283, %v2071
        %2329 = vst.msk [vmem:[%s192 + $0xb4] sm:$0xf] %vm2283, %v2072
        %2330 = vst.msk [vmem:[%s192 + $0xb8] sm:$0xf] %vm2283, %v2073
        %2331 = vst.msk [vmem:[%s192 + $0xbc] sm:$0xf] %vm2283, %v2074
        %2332 = vst.msk [vmem:[%s192 + $0xc0] sm:$0xf] %vm2283, %v2075
        %2333 = vst.msk [vmem:[%s192 + $0xc4] sm:$0xf] %vm2283, %v2076
        %2334 = vst.msk [vmem:[%s192 + $0xc8] sm:$0xf] %vm2283, %v2077
        %2335 = vst.msk [vmem:[%s192 + $0xcc] sm:$0xf] %vm2283, %v2078
        %2336 = vst.msk [vmem:[%s192 + $0xd0] sm:$0xf] %vm2283, %v2079
        %2337 = vst.msk [vmem:[%s192 + $0xd4] sm:$0xf] %vm2283, %v2080
        %2338 = vst.msk [vmem:[%s192 + $0xd8] sm:$0xf] %vm2283, %v2081
        %2339 = vst.msk [vmem:[%s192 + $0xdc] sm:$0xf] %vm2283, %v2082
        %2340 = vst.msk [vmem:[%s192 + $0xe0] sm:$0xf] %vm2283, %v2083
        %2341 = vst.msk [vmem:[%s192 + $0xe4] sm:$0xf] %vm2283, %v2084
        %2342 = vst.msk [vmem:[%s192 + $0xe8] sm:$0xf] %vm2283, %v2085
        %2343 = vst.msk [vmem:[%s192 + $0xec] sm:$0xf] %vm2283, %v2086
        %2344 = vst.msk [vmem:[%s192 + $0xf0] sm:$0xf] %vm2283, %v2087
        %2345 = vst.msk [vmem:[%s192 + $0xf4] sm:$0xf] %vm2283, %v2088
        %2346 = vst.msk [vmem:[%s192 + $0xf8] sm:$0xf] %vm2283, %v2089
        %2347 = vst.msk [vmem:[%s192 + $0xfc] sm:$0xf] %vm2283, %v2090
        %2348 = vst.msk [vmem:[%s192 + $0x100] sm:$0xf] %vm2283, %v2091
        %2349 = vst.msk [vmem:[%s192 + $0x104] sm:$0xf] %vm2283, %v2092
        %2350 = vst.msk [vmem:[%s192 + $0x108] sm:$0xf] %vm2283, %v2093
        %2351 = vst.msk [vmem:[%s192 + $0x10c] sm:$0xf] %vm2283, %v2094
        %2352 = vst.msk [vmem:[%s192 + $0x110] sm:$0xf] %vm2283, %v2095
        %2353 = vst.msk [vmem:[%s192 + $0x114] sm:$0xf] %vm2283, %v2096
        %2354 = vst.msk [vmem:[%s192 + $0x118] sm:$0xf] %vm2283, %v2097
        %2355 = vst.msk [vmem:[%s192 + $0x11c] sm:$0xf] %vm2283, %v2098
        %2356 = vst.msk [vmem:[%s192 + $0x120] sm:$0xf] %vm2283, %v2099
        %2357 = vst.msk [vmem:[%s192 + $0x124] sm:$0xf] %vm2283, %v2100
        %2358 = vst.msk [vmem:[%s192 + $0x128] sm:$0xf] %vm2283, %v2101
        %2359 = vst.msk [vmem:[%s192 + $0x12c] sm:$0xf] %vm2283, %v2102
        %2360 = vst.msk [vmem:[%s192 + $0x130] sm:$0xf] %vm2283, %v2103
        %2361 = vst.msk [vmem:[%s192 + $0x134] sm:$0xf] %vm2283, %v2104
        %2362 = vst.msk [vmem:[%s192 + $0x138] sm:$0xf] %vm2283, %v2105
        %2363 = vst.msk [vmem:[%s192 + $0x13c] sm:$0xf] %vm2283, %v2106
        %2364 = vst.msk [vmem:[%s192 + $0x140] sm:$0xf] %vm2283, %v2107
        %2365 = vst.msk [vmem:[%s192 + $0x144] sm:$0xf] %vm2283, %v2108
        %2366 = vst.msk [vmem:[%s192 + $0x148] sm:$0xf] %vm2283, %v2109
        %2367 = vst.msk [vmem:[%s192 + $0x14c] sm:$0xf] %vm2283, %v2110
        %2368 = vst.msk [vmem:[%s192 + $0x150] sm:$0xf] %vm2283, %v2111
        %2369 = vst.msk [vmem:[%s192 + $0x154] sm:$0xf] %vm2283, %v2112
        %2370 = vst.msk [vmem:[%s192 + $0x158] sm:$0xf] %vm2283, %v2113
        %2371 = vst.msk [vmem:[%s192 + $0x15c] sm:$0xf] %vm2283, %v2114
        %2372 = vst.msk [vmem:[%s192 + $0x160] sm:$0xf] %vm2283, %v2115
        %2373 = vst.msk [vmem:[%s192 + $0x164] sm:$0xf] %vm2283, %v2116
        %2374 = vst.msk [vmem:[%s192 + $0x168] sm:$0xf] %vm2283, %v2117
        %2375 = vst.msk [vmem:[%s192 + $0x16c] sm:$0xf] %vm2283, %v2118
        %2376 = vst.msk [vmem:[%s192 + $0x170] sm:$0xf] %vm2283, %v2119
        %2377 = vst.msk [vmem:[%s192 + $0x174] sm:$0xf] %vm2283, %v2120
        %2378 = vst.msk [vmem:[%s192 + $0x178] sm:$0xf] %vm2283, %v2121
        %2379 = vst.msk [vmem:[%s192 + $0x17c] sm:$0xf] %vm2283, %v2122
        %2380 = vst.msk [vmem:[%s192 + $0x180] sm:$0xf] %vm2283, %v2123
        %2381 = vst.msk [vmem:[%s192 + $0x184] sm:$0xf] %vm2283, %v2124
        %2382 = vst.msk [vmem:[%s192 + $0x188] sm:$0xf] %vm2283, %v2125
        %2383 = vst.msk [vmem:[%s192 + $0x18c] sm:$0xf] %vm2283, %v2126
        %2384 = vst.msk [vmem:[%s192 + $0x190] sm:$0xf] %vm2283, %v2127
        %2385 = vst.msk [vmem:[%s192 + $0x194] sm:$0xf] %vm2283, %v2128
        %2386 = vst.msk [vmem:[%s192 + $0x198] sm:$0xf] %vm2283, %v2129
        %2387 = vst.msk [vmem:[%s192 + $0x19c] sm:$0xf] %vm2283, %v2130
        %2388 = vst.msk [vmem:[%s192 + $0x1a0] sm:$0xf] %vm2283, %v2131
        %2389 = vst.msk [vmem:[%s192 + $0x1a4] sm:$0xf] %vm2283, %v2132
        %2390 = vst.msk [vmem:[%s192 + $0x1a8] sm:$0xf] %vm2283, %v2133
        %2391 = vst.msk [vmem:[%s192 + $0x1ac] sm:$0xf] %vm2283, %v2134
        %2392 = vst.msk [vmem:[%s192 + $0x1b0] sm:$0xf] %vm2283, %v2135
        %2393 = vst.msk [vmem:[%s192 + $0x1b4] sm:$0xf] %vm2283, %v2136
        %2394 = vst.msk [vmem:[%s192 + $0x1b8] sm:$0xf] %vm2283, %v2137
        %2395 = vst.msk [vmem:[%s192 + $0x1bc] sm:$0xf] %vm2283, %v2138
        %2396 = vst.msk [vmem:[%s192 + $0x1c0] sm:$0xf] %vm2283, %v2139
        %2397 = vst.msk [vmem:[%s192 + $0x1c4] sm:$0xf] %vm2283, %v2140
        %2398 = vst.msk [vmem:[%s192 + $0x1c8] sm:$0xf] %vm2283, %v2141
        %2399 = vst.msk [vmem:[%s192 + $0x1cc] sm:$0xf] %vm2283, %v2142
        %2400 = vst.msk [vmem:[%s192 + $0x1d0] sm:$0xf] %vm2283, %v2143
        %2401 = vst.msk [vmem:[%s192 + $0x1d4] sm:$0xf] %vm2283, %v2144
        %2402 = vst.msk [vmem:[%s192 + $0x1d8] sm:$0xf] %vm2283, %v2145
        %2403 = vst.msk [vmem:[%s192 + $0x1dc] sm:$0xf] %vm2283, %v2146
        %2404 = vst.msk [vmem:[%s192 + $0x1e0] sm:$0xf] %vm2283, %v2147
        %2405 = vst.msk [vmem:[%s192 + $0x1e4] sm:$0xf] %vm2283, %v2148
        %2406 = vst.msk [vmem:[%s192 + $0x1e8] sm:$0xf] %vm2283, %v2149
        %2407 = vst.msk [vmem:[%s192 + $0x1ec] sm:$0xf] %vm2283, %v2150
        %2408 = vst.msk [vmem:[%s192 + $0x1f0] sm:$0xf] %vm2283, %v2151
        %2409 = vst.msk [vmem:[%s192 + $0x1f4] sm:$0xf] %vm2283, %v2152
        %2410 = vst.msk [vmem:[%s192 + $0x1f8] sm:$0xf] %vm2283, %v2153
        %2411 = vst.msk [vmem:[%s192 + $0x1fc] sm:$0xf] %vm2283, %v2154
        %s2412 = smul.u32 128, %s17
        %p2413 = scmp.lt.s32.totalorder %s2412, 255
        %s2414 = scalar_select %p2413, %s2412, 255
        %s2415 = smul.addr %s2414, 4
        %s2416 = scalar_lea.vmem %s3, %s2415
        // Predicated region
        $region37: #{tpu_custom_call.1} parent=31 // pred_check
          %p2417 = pneg %p103
        $region38: #{tpu_custom_call.1} parent=31 // pred_check_branch
          %2419 = sbr.rel (%p2417) target = $region40
        $region39: #{tpu_custom_call.1} parent=31 // pred_region
          %s2420 = smul.u32 128, %s17
        $region40: #{tpu_custom_call.1} parent=31 // pred_fallthru
          _
      $region32: #{tpu_custom_call.1} parent=5 // pred_fallthru
        _
      %p2421 = scmp.le.s32.totalorder 2, %s12
      // Predicated region
      $region41: #{tpu_custom_call.1} parent=5 // pred_check
        %p2422 = pneg %p2421
      $region42: #{tpu_custom_call.1} parent=5 // pred_check_branch
        %2424 = sbr.rel (%p2422) target = $region44
      $region43: #{tpu_custom_call.1} parent=5 // pred_region
        %s2425 = ssub.s32 %s12, 2
        // Predicated region
        $region45: #{tpu_custom_call.1} parent=43 // pred_check
          %p2426 = pneg %p109
        $region46: #{tpu_custom_call.1} parent=43 // pred_check_branch
          %2428 = sbr.rel (%p2426) target = $region48
        $region47: #{tpu_custom_call.1} parent=43 // pred_region
          %s2429 = smul.u32 128, %s18
          %p2430 = scmp.lt.s32.totalorder %s2429, 255
          %s2431 = scalar_select %p2430, %s2429, 255
          %s2432 = smul.addr %s2431, 4
          %s2433 = scalar_lea.vmem %s3, %s2432
        $region48: #{tpu_custom_call.1} parent=43 // pred_fallthru
          _
      $region44: #{tpu_custom_call.1} parent=5 // pred_fallthru
        _
    $region6: #{tpu_custom_call.1} parent=1 // loop_footer
      %s16 = sadd.s32 1, %s12
    $region7: #{tpu_custom_call.1} parent=1 // loop_footer_branch
      %11 = sbr.rel target = $region3
    $region8: #{tpu_custom_call.1} parent=1 // loop_exit
      _
    %2434 = vsyncpa [#allocation3], 1
    %s2435 = scalar_lea.sflag [#allocation3], 1
    %2436 = vsyncpa %s2435, 1

</llo_original>
